<compile_context>
chip_gen: v6e
topology: v6e:2x2x1
jax: 0.10.0
libtpu: 0.0.40
codegen_flags: <defaults>
</compile_context>

<pallas_src>
import math

import jax
import jax.numpy as jnp
import numpy as np
from jax.experimental import pallas as pl
from jax.experimental.pallas import tpu as pltpu


_DEFAULT_VMEM_CAPACITY = 64 * 1024 * 1024  # v7x per-TC VMEM (smallest of current parts)


def _vmem_budget_bytes():
    """Usable scoped-VMEM budget: device capacity minus headroom (fallback: 64 MiB)."""
    try:
        cap = int(pltpu.get_tpu_info().vmem_capacity_bytes)
    except Exception:
        cap = _DEFAULT_VMEM_CAPACITY
    return max(cap - 8 * 1024 * 1024, 32 * 1024 * 1024)


def _make_modfc_kernel(demod: bool, compute_dtype):
    """Per-(batch, N-tile) kernel with compile-time constants baked in."""

    def kernel(s_ref, w_ref, x_ref, o_ref, wmod_ref):
        # s_ref    : (1, in_f, 1)  f32          -- lrelu'd affine output * mod_scale (column)
        # w_ref    : (in_f, out_f) f32          -- base weight (resident across the grid)
        # x_ref    : (1, tile_n, in_f) compute  -- streamed activation tile (pre-cast in wrapper)
        # o_ref    : (1, tile_n, out_f)         -- streamed output tile
        # wmod_ref : VMEM (in_f, out_f) compute -- per-batch modulated weight cache
        #
        # NOTE: the weight cache relies on the N axis (grid axis 1) running sequentially
        # on the same core after each batch change -> axis 1 MUST stay "arbitrary".

        # --- modulation + demodulation: once per batch element (first N tile only) ---
        @pl.when(pl.program_id(1) == 0)
        def _():
            w = w_ref[...].astype(jnp.float32) * s_ref[0]                   # modulation (f32)
            if demod:
                w = w * jax.lax.rsqrt(jnp.sum(w * w, axis=0, keepdims=True) + 1e-8)
            wmod_ref[...] = w.astype(compute_dtype)

        # --- bmm hot path on the MXU (f32 accumulation) ---
        o_ref[0] = jnp.dot(x_ref[0], wmod_ref[...],
                           preferred_element_type=jnp.float32).astype(o_ref.dtype)

    return kernel


def _bmm_kernel(w_ref, x_ref, o_ref):
    # Pure streaming bmm (weight precomputed in the wrapper).
    # w_ref: (1, in_f, out_f), x_ref: (1, tile_n, in_f), o_ref: (1, tile_n, out_f)
    o_ref[0] = jnp.dot(x_ref[0], w_ref[0],
                       preferred_element_type=jnp.float32).astype(o_ref.dtype)


def modulated_fc(x, style, affine_w, affine_b, base_w, *, demod=True, gain=1.0,
                 tile_n=512, compute_dtype=jnp.bfloat16, out_dtype=None,
                 precompute_weight=None, single_buffer_weight=True,
                 vmem_limit_bytes=None):
    """ModulatedFC forward.

    x: (B, N, in_f), style: (B, style_dim), affine_w: (in_f, style_dim),
    affine_b: (in_f,), base_w: (in_f, out_f).  Returns (B, N, out_f) in `out_dtype`
    (defaults to x.dtype; pass jnp.bfloat16 to also halve the output HBM stream).

    compute_dtype: dtype of the streamed x and of the MXU weight (modulation /
    demodulation math is always f32).  Pass jnp.float32 for bit-closer results.
    precompute_weight: if True, the modulated weight is computed in the wrapper and the
    kernel is a pure bmm with both grid axes parallel.  Default: auto (True iff B == 1).
    """
    B, N, in_f = x.shape
    style_dim = style.shape[1]
    out_f = base_w.shape[1]
    out_dtype = x.dtype if out_dtype is None else out_dtype
    if precompute_weight is None:
        precompute_weight = (B == 1)      # a single batch element can't feed 2 TCs via B

    affine_scale = 1.0 * style_dim ** (-0.5)          # eq-lr Linear scale (Linear gain=1.0)
    mod_scale = gain * (in_f * out_f) ** (-0.5)       # ModulatedFC scale

    # --- tiny affine (style -> s) + bias_act('lrelu'): hoisted out of the kernel ---
    s = style.astype(jnp.float32) @ (affine_w.astype(jnp.float32) * affine_scale).T
    s = s + affine_b.astype(jnp.float32)[None, :]
    s = jnp.where(s >= 0.0, s, 0.2 * s) * math.sqrt(2.0)            # lrelu + def_gain sqrt(2)
    s_col = (s * mod_scale)[:, :, None]                             # (B, in_f, 1) column

    # --- stream x in compute_dtype: halves HBM bytes on the dominant stream (perf review) ---
    x = x.astype(compute_dtype)

    # --- tile_n / VMEM sizing against the real per-core budget (perf review) ---
    budget = _vmem_budget_bytes() if vmem_limit_bytes is None else int(vmem_limit_bytes)
    xb = jnp.dtype(compute_dtype).itemsize
    ob = jnp.dtype(out_dtype).itemsize
    wb = jnp.dtype(base_w.dtype).itemsize
    cb = jnp.dtype(compute_dtype).itemsize

    def _estimate(tn):
        if precompute_weight:
            fixed = 2 * in_f * out_f * cb                    # double-buffered per-batch weight
        else:
            fixed = in_f * out_f * (2 * wb + cb)             # base weight (<=2 bufs) + scratch
        return 2 * tn * (in_f * xb + out_f * ob) + fixed + 2 * in_f * 4 + (1 << 16)

    tile_n = int(min(tile_n, N))
    tile_n = max(8, (tile_n // 8) * 8)
    while tile_n > 8 and _estimate(tile_n) > budget:
        tile_n = max(8, (tile_n // 2 // 8) * 8)              # shrink tile, don't over-declare VMEM
    grid_n = pl.cdiv(N, tile_n)

    if vmem_limit_bytes is None:
        vmem_limit_bytes = int(min(budget, max(2 * _estimate(tile_n), 32 * 1024 * 1024)))

    if precompute_weight:
        # Weight prep (f32 math) in the wrapper; kernel is a pure bmm, N axis fully parallel.
        w = base_w[None].astype(jnp.float32) * s_col                    # (B, in_f, out_f)
        if demod:
            w = w * jax.lax.rsqrt(jnp.sum(w * w, axis=1, keepdims=True) + 1e-8)
        w = w.astype(compute_dtype)
        return pl.pallas_call(
            _bmm_kernel,
            out_shape=jax.ShapeDtypeStruct((B, N, out_f), out_dtype),
            grid_spec=pltpu.PrefetchScalarGridSpec(
                num_scalar_prefetch=0,
                grid=(B, grid_n),
                in_specs=[
                    pl.BlockSpec((1, in_f, out_f), lambda b, n: (b, 0, 0)),   # per-batch weight
                    pl.BlockSpec((1, tile_n, in_f), lambda b, n: (b, n, 0)),  # x tile
                ],
                out_specs=pl.BlockSpec((1, tile_n, out_f), lambda b, n: (b, n, 0)),
            ),
            compiler_params=pltpu.CompilerParams(
                dimension_semantics=("parallel", "parallel"),  # no cross-N state -> N parallel
                vmem_limit_bytes=vmem_limit_bytes,
            ),
        )(w, x)

    kernel = _make_modfc_kernel(demod, compute_dtype)

    def call(single_buffer):
        if single_buffer:
            # Resident, never re-fetched -> a second pipeline buffer is pure VMEM waste.
            w_spec = pl.BlockSpec((in_f, out_f), lambda b, n: (0, 0),
                                  pipeline_mode=pl.Buffered(1))
        else:
            w_spec = pl.BlockSpec((in_f, out_f), lambda b, n: (0, 0))
        return pl.pallas_call(
            kernel,
            out_shape=jax.ShapeDtypeStruct((B, N, out_f), out_dtype),
            grid_spec=pltpu.PrefetchScalarGridSpec(
                num_scalar_prefetch=0,
                grid=(B, grid_n),
                in_specs=[
                    pl.BlockSpec((1, in_f, 1), lambda b, n: (b, 0, 0)),       # style column
                    w_spec,                                                   # base weight
                    pl.BlockSpec((1, tile_n, in_f), lambda b, n: (b, n, 0)),  # x tile
                ],
                out_specs=pl.BlockSpec((1, tile_n, out_f), lambda b, n: (b, n, 0)),
                scratch_shapes=[pltpu.VMEM((in_f, out_f), compute_dtype)],
            ),
            compiler_params=pltpu.CompilerParams(
                # Axis 1 (N) MUST be "arbitrary": the per-batch weight scratch is written
                # at n == 0 and reused by all subsequent N tiles of the same batch.
                dimension_semantics=("parallel", "arbitrary"),
                vmem_limit_bytes=vmem_limit_bytes,
            ),
        )(s_col, base_w, x)

    if single_buffer_weight:
        try:
            return call(True)
        except Exception:
            # pl.Buffered(1) not accepted by this jax/Mosaic build -> default buffering.
            pass
    return call(False)


def modulated_fc_reference(x, style, affine_w, affine_b, base_w, *, demod=True, gain=1.0):
    """Pure-JAX reference implementing the same math as the PyTorch module (all f32)."""
    B, N, in_f = x.shape
    style_dim = style.shape[1]
    out_f = base_w.shape[1]
    affine_scale = 1.0 * style_dim ** (-0.5)
    mod_scale = gain * (in_f * out_f) ** (-0.5)

    s = style @ (affine_w * affine_scale).T + affine_b[None, :]
    s = jnp.where(s >= 0.0, s, 0.2 * s) * math.sqrt(2.0)
    w = base_w[None] * s[:, :, None] * mod_scale                    # (B, in_f, out_f)
    if demod:
        d = jax.lax.rsqrt(jnp.sum(w * w, axis=1, keepdims=True) + 1e-8)
        w = w * d
    return jnp.einsum("bni,bio->bno", x, w)


if __name__ == "__main__":
    # Small but lane-dense shapes: feature dims multiple of 128, two 512-row N tiles
    # per batch element (exercises the per-batch weight cache across N tiles).
    B, N = 2, 1024
    in_features, style_dim, out_features = 128, 64, 128

    key = jax.random.PRNGKey(0)
    k_x, k_s, k_aw, k_w = jax.random.split(key, 4)

    x = jax.random.normal(k_x, (B, N, in_features), dtype=jnp.float32)
    style = jax.random.normal(k_s, (B, style_dim), dtype=jnp.float32)

    # Parameters (torch.randn init; affine bias filled with 1.0 per __init__).
    affine_w = jax.random.normal(k_aw, (in_features, style_dim), dtype=jnp.float32)
    affine_b = jnp.ones((in_features,), dtype=jnp.float32)
    base_w = jax.random.normal(k_w, (in_features, out_features), dtype=jnp.float32)

    ref = modulated_fc_reference(x, style, affine_w, affine_b, base_w, demod=True, gain=1.0)

    # Fast path: bf16 x stream + bf16 MXU matmul (f32 accumulation, f32 demod math).
    out_bf16 = modulated_fc(x, style, affine_w, affine_b, base_w, demod=True, gain=1.0,
                            tile_n=512, compute_dtype=jnp.bfloat16)
    out_bf16 = jax.block_until_ready(out_bf16)
    np.testing.assert_allclose(np.asarray(out_bf16), np.asarray(ref), rtol=3e-2, atol=3e-2)

    # Bit-closer path: f32 streams + f32 matmul.
    out_f32 = modulated_fc(x, style, affine_w, affine_b, base_w, demod=True, gain=1.0,
                           tile_n=512, compute_dtype=jnp.float32)
    out_f32 = jax.block_until_ready(out_f32)
    np.testing.assert_allclose(np.asarray(out_f32), np.asarray(ref), rtol=1e-2, atol=1e-2)

    # B == 1 path: weight precomputed in the wrapper, pure-bmm kernel with BOTH grid axes
    # parallel (v7x can shard N across its two TensorCores); bf16 output stream.
    out_b1 = modulated_fc(x[:1], style[:1], affine_w, affine_b, base_w, demod=True, gain=1.0,
                          tile_n=512, compute_dtype=jnp.bfloat16, out_dtype=jnp.bfloat16)
    out_b1 = jax.block_until_ready(out_b1)
    np.testing.assert_allclose(np.asarray(out_b1, dtype=np.float32), np.asarray(ref[:1]),
                               rtol=5e-2, atol=5e-2)

    print("KERNEL_OK")
</pallas_src>

<mosaic_0001>
module attributes {stable_mosaic.version = 11 : i64} {
  func.func @kernel(%arg0: i32, %arg1: i32, %arg2: memref<1x128x1xf32, #tpu.memory_space<vmem>>, %arg3: memref<128x128xf32, #tpu.memory_space<vmem>>, %arg4: memref<1x512x128xbf16, #tpu.memory_space<vmem>>, %arg5: memref<1x512x128xf32, #tpu.memory_space<vmem>>, %arg6: memref<128x128xbf16, #tpu.memory_space<vmem>>) attributes {dimension_semantics = [#tpu.dimension_semantics<parallel>, #tpu.dimension_semantics<arbitrary>], iteration_bounds = array<i64: 2, 2>, scalar_prefetch = 0 : i64, scratch_operands = 1 : i64, tpu.core_type = #tpu.core_type<tc>, window_params = [{transform_indices = @transform_0, window_bounds = array<i64: 1, 128, 1>}, {pipeline_mode = #tpu.pipeline_mode<synchronous>, transform_indices = @transform_1, window_bounds = array<i64: 128, 128>}, {transform_indices = @transform_2, window_bounds = array<i64: 1, 512, 128>}, {transform_indices = @transform_3, window_bounds = array<i64: 1, 512, 128>}]} {
    %c0_i32 = arith.constant 0 : i32
    %0 = arith.cmpi eq, %arg1, %c0_i32 : i32
    %1 = arith.extui %0 : i1 to i32
    %c0_i32_0 = arith.constant 0 : i32
    %2 = arith.cmpi ne, %1, %c0_i32_0 : i32
    scf.if %2 {
      %c0_8 = arith.constant 0 : index
      %c0_9 = arith.constant 0 : index
      %10 = vector.load %arg3[%c0_8, %c0_9] : memref<128x128xf32, #tpu.memory_space<vmem>>, vector<128x128xf32>
      %c0_10 = arith.constant 0 : index
      %c0_11 = arith.constant 0 : index
      %c0_12 = arith.constant 0 : index
      %11 = vector.load %arg2[%c0_10, %c0_11, %c0_12] : memref<1x128x1xf32, #tpu.memory_space<vmem>>, vector<1x128x1xf32>
      %12 = vector.shape_cast %11 : vector<1x128x1xf32> to vector<128x1xf32>
      %13 = vector.broadcast %12 : vector<128x1xf32> to vector<128x128xf32>
      %14 = arith.mulf %10, %13 : vector<128x128xf32>
      %15 = arith.mulf %14, %14 : vector<128x128xf32>
      %cst_13 = arith.constant dense<0.000000e+00> : vector<128xf32>
      %16 = vector.multi_reduction <add>, %15, %cst_13 [0] : vector<128x128xf32> to vector<128xf32>
      %17 = vector.shape_cast %16 : vector<128xf32> to vector<1x128xf32>
      %cst_14 = arith.constant 9.99999993E-9 : f32
      %18 = vector.broadcast %cst_14 : f32 to vector<1x128xf32>
      %19 = arith.addf %17, %18 : vector<1x128xf32>
      %20 = math.rsqrt %19 : vector<1x128xf32>
      %21 = vector.broadcast %20 : vector<1x128xf32> to vector<128x128xf32>
      %22 = arith.mulf %14, %21 : vector<128x128xf32>
      %23 = arith.truncf %22 : vector<128x128xf32> to vector<128x128xbf16>
      %c0_15 = arith.constant 0 : index
      %c0_16 = arith.constant 0 : index
      %24 = vector.load %arg6[%c0_15, %c0_16] : memref<128x128xbf16, #tpu.memory_space<vmem>>, vector<128x128xbf16>
      tpu.vector_store %arg6[%c0_15, %c0_16], %23 {strides = array<i32>} : memref<128x128xbf16, #tpu.memory_space<vmem>>, vector<128x128xbf16>,
    } else {
    }
    %c0 = arith.constant 0 : index
    %c0_1 = arith.constant 0 : index
    %c0_2 = arith.constant 0 : index
    %3 = vector.load %arg4[%c0, %c0_1, %c0_2] : memref<1x512x128xbf16, #tpu.memory_space<vmem>>, vector<1x512x128xbf16>
    %4 = vector.shape_cast %3 : vector<1x512x128xbf16> to vector<512x128xbf16>
    %c0_3 = arith.constant 0 : index
    %c0_4 = arith.constant 0 : index
    %5 = vector.load %arg6[%c0_3, %c0_4] : memref<128x128xbf16, #tpu.memory_space<vmem>>, vector<128x128xbf16>
    %cst = arith.constant dense<0.000000e+00> : vector<512x128xf32>
    %6 = tpu.matmul %4, %5, %cst {dimension_numbers = #tpu.dot_dimension_numbers<[1], [0], [0], [1], [0, 0, 1, 1], [], []>} : vector<512x128xbf16>, vector<128x128xbf16>, vector<512x128xf32> -> vector<512x128xf32>
    %c0_5 = arith.constant 0 : index
    %c0_6 = arith.constant 0 : index
    %c0_7 = arith.constant 0 : index
    %7 = vector.load %arg5[%c0_5, %c0_6, %c0_7] : memref<1x512x128xf32, #tpu.memory_space<vmem>>, vector<1x512x128xf32>
    %8 = vector.shape_cast %7 : vector<1x512x128xf32> to vector<512x128xf32>
    %9 = vector.shape_cast %6 : vector<512x128xf32> to vector<1x512x128xf32>
    tpu.vector_store %arg5[%c0_5, %c0_6, %c0_7], %9 {strides = array<i32>} : memref<1x512x128xf32, #tpu.memory_space<vmem>>, vector<1x512x128xf32>,
    return
  }
  func.func @transform_0(%arg0: i32, %arg1: i32) -> (i32, i32, i32) {
    %c0_i32 = arith.constant 0 : i32
    %c0_i32_0 = arith.constant 0 : i32
    %c0_i32_1 = arith.constant 0 : i32
    return %arg0, %c0_i32, %c0_i32_0 : i32, i32, i32
  }
  func.func @transform_1(%arg0: i32, %arg1: i32) -> (i32, i32) {
    %c0_i32 = arith.constant 0 : i32
    %c0_i32_0 = arith.constant 0 : i32
    %c0_i32_1 = arith.constant 0 : i32
    return %c0_i32, %c0_i32_0 : i32, i32
  }
  func.func @transform_2(%arg0: i32, %arg1: i32) -> (i32, i32, i32) {
    %c0_i32 = arith.constant 0 : i32
    %c0_i32_0 = arith.constant 0 : i32
    return %arg0, %arg1, %c0_i32 : i32, i32, i32
  }
  func.func @transform_3(%arg0: i32, %arg1: i32) -> (i32, i32, i32) {
    %c0_i32 = arith.constant 0 : i32
    %c0_i32_0 = arith.constant 0 : i32
    return %arg0, %arg1, %c0_i32 : i32, i32, i32
  }
}

module attributes {stable_mosaic.version = 11 : i64} {
  func.func @kernel(%arg0: i32, %arg1: i32, %arg2: memref<1x128x1xf32, #tpu.memory_space<vmem>>, %arg3: memref<128x128xf32, #tpu.memory_space<vmem>>, %arg4: memref<1x512x128xbf16, #tpu.memory_space<vmem>>, %arg5: memref<1x512x128xf32, #tpu.memory_space<vmem>>, %arg6: memref<128x128xbf16, #tpu.memory_space<vmem>>) attributes {dimension_semantics = [#tpu.dimension_semantics<parallel>, #tpu.dimension_semantics<arbitrary>], iteration_bounds = array<i64: 2, 2>, scalar_prefetch = 0 : i64, scratch_operands = 1 : i64, tpu.core_type = #tpu.core_type<tc>, window_params = [{transform_indices = @transform_0, window_bounds = array<i64: 1, 128, 1>}, {pipeline_mode = #tpu.pipeline_mode<synchronous>, transform_indices = @transform_1, window_bounds = array<i64: 128, 128>}, {transform_indices = @transform_2, window_bounds = array<i64: 1, 512, 128>}, {transform_indices = @transform_3, window_bounds = array<i64: 1, 512, 128>}]} {
    %c0_i32 = arith.constant 0 : i32
    %0 = arith.cmpi eq, %arg1, %c0_i32 : i32
    %1 = arith.extui %0 : i1 to i32
    %c0_i32_0 = arith.constant 0 : i32
    %2 = arith.cmpi ne, %1, %c0_i32_0 : i32
    scf.if %2 {
      %c0_8 = arith.constant 0 : index
      %c0_9 = arith.constant 0 : index
      %10 = vector.load %arg3[%c0_8, %c0_9] : memref<128x128xf32, #tpu.memory_space<vmem>>, vector<128x128xf32>
      %c0_10 = arith.constant 0 : index
      %c0_11 = arith.constant 0 : index
      %c0_12 = arith.constant 0 : index
      %11 = vector.load %arg2[%c0_10, %c0_11, %c0_12] : memref<1x128x1xf32, #tpu.memory_space<vmem>>, vector<1x128x1xf32>
      %12 = vector.shape_cast %11 : vector<1x128x1xf32> to vector<128x1xf32>
      %13 = vector.broadcast %12 : vector<128x1xf32> to vector<128x128xf32>
      %14 = arith.mulf %10, %13 : vector<128x128xf32>
      %15 = arith.mulf %14, %14 : vector<128x128xf32>
      %cst_13 = arith.constant dense<0.000000e+00> : vector<128xf32>
      %16 = vector.multi_reduction <add>, %15, %cst_13 [0] : vector<128x128xf32> to vector<128xf32>
      %17 = vector.shape_cast %16 : vector<128xf32> to vector<1x128xf32>
      %cst_14 = arith.constant 9.99999993E-9 : f32
      %18 = vector.broadcast %cst_14 : f32 to vector<1x128xf32>
      %19 = arith.addf %17, %18 : vector<1x128xf32>
      %20 = math.rsqrt %19 : vector<1x128xf32>
      %21 = vector.broadcast %20 : vector<1x128xf32> to vector<128x128xf32>
      %22 = arith.mulf %14, %21 : vector<128x128xf32>
      %23 = arith.truncf %22 : vector<128x128xf32> to vector<128x128xbf16>
      %c0_15 = arith.constant 0 : index
      %c0_16 = arith.constant 0 : index
      %24 = vector.load %arg6[%c0_15, %c0_16] : memref<128x128xbf16, #tpu.memory_space<vmem>>, vector<128x128xbf16>
      tpu.vector_store %arg6[%c0_15, %c0_16], %23 {strides = array<i32>} : memref<128x128xbf16, #tpu.memory_space<vmem>>, vector<128x128xbf16>,
    } else {
    }
    %c0 = arith.constant 0 : index
    %c0_1 = arith.constant 0 : index
    %c0_2 = arith.constant 0 : index
    %3 = vector.load %arg4[%c0, %c0_1, %c0_2] : memref<1x512x128xbf16, #tpu.memory_space<vmem>>, vector<1x512x128xbf16>
    %4 = vector.shape_cast %3 : vector<1x512x128xbf16> to vector<512x128xbf16>
    %c0_3 = arith.constant 0 : index
    %c0_4 = arith.constant 0 : index
    %5 = vector.load %arg6[%c0_3, %c0_4] : memref<128x128xbf16, #tpu.memory_space<vmem>>, vector<128x128xbf16>
    %cst = arith.constant dense<0.000000e+00> : vector<512x128xf32>
    %6 = tpu.matmul %4, %5, %cst {dimension_numbers = #tpu.dot_dimension_numbers<[1], [0], [0], [1], [0, 0, 1, 1], [], []>} : vector<512x128xbf16>, vector<128x128xbf16>, vector<512x128xf32> -> vector<512x128xf32>
    %c0_5 = arith.constant 0 : index
    %c0_6 = arith.constant 0 : index
    %c0_7 = arith.constant 0 : index
    %7 = vector.load %arg5[%c0_5, %c0_6, %c0_7] : memref<1x512x128xf32, #tpu.memory_space<vmem>>, vector<1x512x128xf32>
    %8 = vector.shape_cast %7 : vector<1x512x128xf32> to vector<512x128xf32>
    %9 = vector.shape_cast %6 : vector<512x128xf32> to vector<1x512x128xf32>
    tpu.vector_store %arg5[%c0_5, %c0_6, %c0_7], %9 {strides = array<i32>} : memref<1x512x128xf32, #tpu.memory_space<vmem>>, vector<1x512x128xf32>,
    return
  }
  func.func @transform_0(%arg0: i32, %arg1: i32) -> (i32, i32, i32) {
    %c0_i32 = arith.constant 0 : i32
    %c0_i32_0 = arith.constant 0 : i32
    %c0_i32_1 = arith.constant 0 : i32
    return %arg0, %c0_i32, %c0_i32_0 : i32, i32, i32
  }
  func.func @transform_1(%arg0: i32, %arg1: i32) -> (i32, i32) {
    %c0_i32 = arith.constant 0 : i32
    %c0_i32_0 = arith.constant 0 : i32
    %c0_i32_1 = arith.constant 0 : i32
    return %c0_i32, %c0_i32_0 : i32, i32
  }
  func.func @transform_2(%arg0: i32, %arg1: i32) -> (i32, i32, i32) {
    %c0_i32 = arith.constant 0 : i32
    %c0_i32_0 = arith.constant 0 : i32
    return %arg0, %arg1, %c0_i32 : i32, i32, i32
  }
  func.func @transform_3(%arg0: i32, %arg1: i32) -> (i32, i32, i32) {
    %c0_i32 = arith.constant 0 : i32
    %c0_i32_0 = arith.constant 0 : i32
    return %arg0, %arg1, %c0_i32 : i32, i32, i32
  }
}

</mosaic_0001>

<llo_original>
// kernel: tpu_custom_call.1
$region0: #{tpu_custom_call.1}
  #allocation0 [shape = 'u32[]', space=smem, size = 0x4, offset = 0x4, fixed_abs, tag = 'smem constant byte address 0x4 - core index']
  #allocation1 [shape = 'u32[144,128]{1,0:T(1,128)}', space=vmem, size = 0x12000, scoped, tag = 'internal scratch']
  #allocation2 [shape = 'bf16[128,128]{1,0:T(8,128)(2,1)}', space=vmem, size = 0x8000, scoped, tag = 'scratch operand']
  %s0 = inlined_call_operand.vmem [shape: f32[2,128,1], index: 0, kind: input, shape index: {}]
  %s1 = inlined_call_operand.vmem [shape: f32[128,128], index: 1, kind: input, shape index: {}]
  %s2 = inlined_call_operand.hbm [shape: bf16[2,1024,128], index: 2, kind: input, shape index: {}]
  %s3 = inlined_call_operand.hbm [shape: f32[2,1024,128], index: 3, kind: output, shape index: {}]
  %s4 = sld [smem:[#allocation0]]
  $region53: #{tpu_custom_call.1} parent=0
    _
  %s6 = ssub.s32 1, %s4
  %s7 = scalar_select 0, %s6, %s4
  $region1: #{tpu_custom_call.1} parent=0
    #allocation3 [shape = 'u8[262144]{0}', space=vmem, size = 0x40000, scoped, tag = 'input window, operand 2']
    #allocation4 [shape = 's32[2]{0}', space=sflag, size = 0x8, scoped, tag = 'scoped memory for tpu_custom_call.1']
    #allocation5 [shape = 's32[2]{0}', space=sflag, size = 0x8, scoped, tag = 'scoped memory for tpu_custom_call.1']
    #allocation6 [shape = 'u8[524288]{0}', space=vmem, size = 0x80000, scoped, tag = 'output window, operand 0']
    %8 = vsyncpa [#allocation4], 0
    %s9 = scalar_lea.sflag [#allocation4], 1
    %10 = vsyncpa %s9, 0
    %11 = vsyncpa [#allocation5], 0
    %s12 = scalar_lea.sflag [#allocation5], 1
    %13 = vsyncpa %s12, 0
    loop: start=0, step=1, limit=6
    $region2: #{tpu_custom_call.1} parent=1 // loop_pre_header
      _
    $region3: #{tpu_custom_call.1} parent=1 // loop_header
      %s15 = sphi 0, %s19
      %p16 = scmp.ge.s32.totalorder %s15, 6
      %s22 = sphi 0, %s34
      %s23 = sphi 0, %s30
      %s24 = sphi 0, %s22
      %s25 = sphi 0, %s23
      %s26 = sphi 0, %s24
      %s27 = sphi 0, %s25
      %s37 = sphi 0, %s39
      %s40 = sphi 0, %s37
      %s41 = sphi 0, %s40
      %s57 = sphi 0, %s41
      %s61 = sphi 0, %s61
      %s63 = sphi 0, %s61
      %s64 = sphi 0, %s63
      %s78 = sphi 0, %s64
      %s86 = sphi 0, %s88
      %s89 = sphi 0, %s86
      %s90 = sphi 0, %s89
      %s106 = sphi 0, %s90
      %s114 = sphi 0, %s116
      %s117 = sphi 0, %s114
      %s118 = sphi 0, %s117
      %s134 = sphi 0, %s118
    $region4: #{tpu_custom_call.1} parent=1 // loop_header_branch
      %18 = sbr.rel (%p16) target = $region8
    $region5: #{tpu_custom_call.1} parent=1 // loop_body
      %s20 = ssub.s32 %s15, 1
      %s21 = ssub.s32 %s15, 2
      %s28 = sadd.s32 1, %s23
      %p29 = scmp.ge.s32.totalorder %s28, 2
      %s30 = scalar_select %p29, 0, %s28
      %s31 = sadd.s32 1, %s22
      %s32 = scalar_select %p29, %s31, %s22
      %p33 = scmp.ge.s32.totalorder %s32, 2
      %s34 = scalar_select %p33, 0, %s32
      %s35 = ssub.s32 %s22, %s34
      %p36 = scmp.eq.s32.totalorder %s35, 0
      %s38 = sadd.s32 %s37, 1
      %s39 = scalar_select %p36, %s37, %s38
      %p42 = pneg %p36
      %p43 = scmp.eq.s32.totalorder %s15, 3
      %p44 = por %p42, %p43
      %p45 = scmp.ne.s32.totalorder %s37, %s40
      %p46 = scmp.eq.s32.totalorder %s15, 0
      %p47 = por %p45, %p46
      %p48 = scmp.ne.s32.totalorder %s37, %s40
      %p49 = scmp.eq.s32.totalorder %s20, 3
      %p50 = por %p48, %p49
      %p51 = scmp.ne.s32.totalorder %s40, %s41
      %p52 = scmp.eq.s32.totalorder %s20, 0
      %p53 = por %p51, %p52
      %p54 = scmp.ne.s32.totalorder %s40, %s41
      %p55 = scmp.eq.s32.totalorder %s21, 3
      %p56 = por %p54, %p55
      %p58 = scmp.ne.s32.totalorder %s41, %s57
      %p59 = scmp.eq.s32.totalorder %s21, 0
      %p60 = por %p58, %p59
      %s62 = sadd.s32 %s61, 1
      %p65 = scmp.eq.s32.totalorder %s15, 3
      %p66 = scmp.ne.s32.totalorder %s61, %s63
      %p67 = scmp.eq.s32.totalorder %s15, 0
      %p68 = por %p66, %p67
      %p69 = scmp.ne.s32.totalorder %s61, %s63
      %p70 = scmp.eq.s32.totalorder %s20, 3
      %p71 = por %p69, %p70
      %p72 = scmp.ne.s32.totalorder %s63, %s64
      %p73 = scmp.eq.s32.totalorder %s20, 0
      %p74 = por %p72, %p73
      %p75 = scmp.ne.s32.totalorder %s63, %s64
      %p76 = scmp.eq.s32.totalorder %s21, 3
      %p77 = por %p75, %p76
      %p79 = scmp.ne.s32.totalorder %s64, %s78
      %p80 = scmp.eq.s32.totalorder %s21, 0
      %p81 = por %p79, %p80
      %s82 = ssub.s32 %s22, %s34
      %s83 = ssub.s32 %s23, %s30
      %s84 = sor.u32 %s82, %s83
      %p85 = scmp.eq.s32.totalorder %s84, 0
      %s87 = sadd.s32 %s86, 1
      %s88 = scalar_select %p85, %s86, %s87
      %p91 = pneg %p85
      %p92 = scmp.eq.s32.totalorder %s15, 3
      %p93 = por %p91, %p92
      %p94 = scmp.ne.s32.totalorder %s86, %s89
      %p95 = scmp.eq.s32.totalorder %s15, 0
      %p96 = por %p94, %p95
      %p97 = scmp.ne.s32.totalorder %s86, %s89
      %p98 = scmp.eq.s32.totalorder %s20, 3
      %p99 = por %p97, %p98
      %p100 = scmp.ne.s32.totalorder %s89, %s90
      %p101 = scmp.eq.s32.totalorder %s20, 0
      %p102 = por %p100, %p101
      %p103 = scmp.ne.s32.totalorder %s89, %s90
      %p104 = scmp.eq.s32.totalorder %s21, 3
      %p105 = por %p103, %p104
      %p107 = scmp.ne.s32.totalorder %s90, %s106
      %p108 = scmp.eq.s32.totalorder %s21, 0
      %p109 = por %p107, %p108
      %s110 = ssub.s32 %s22, %s34
      %s111 = ssub.s32 %s23, %s30
      %s112 = sor.u32 %s110, %s111
      %p113 = scmp.eq.s32.totalorder %s112, 0
      %s115 = sadd.s32 %s114, 1
      %s116 = scalar_select %p113, %s114, %s115
      %p119 = pneg %p113
      %p120 = scmp.eq.s32.totalorder %s15, 3
      %p121 = por %p119, %p120
      %p122 = scmp.ne.s32.totalorder %s114, %s117
      %p123 = scmp.eq.s32.totalorder %s15, 0
      %p124 = por %p122, %p123
      %p125 = scmp.ne.s32.totalorder %s114, %s117
      %p126 = scmp.eq.s32.totalorder %s20, 3
      %p127 = por %p125, %p126
      %p128 = scmp.ne.s32.totalorder %s117, %s118
      %p129 = scmp.eq.s32.totalorder %s20, 0
      %p130 = por %p128, %p129
      %p131 = scmp.ne.s32.totalorder %s117, %s118
      %p132 = scmp.eq.s32.totalorder %s21, 3
      %p133 = por %p131, %p132
      %p135 = scmp.ne.s32.totalorder %s118, %s134
      %p136 = scmp.eq.s32.totalorder %s21, 0
      %p137 = por %p135, %p136
      %p138 = scmp.le.s32.totalorder 1, %s15
      %p139 = scmp.lt.s32.totalorder %s15, 5
      %p140 = pnand %p138, %p139
      %p141 = pneg %p140
      // Predicated region
      $region9: #{tpu_custom_call.1} parent=5 // pred_check
        _
      $region10: #{tpu_custom_call.1} parent=5 // pred_check_branch
        %143 = sbr.rel (%p140) target = $region12
      $region11: #{tpu_custom_call.1} parent=5 // pred_region
        %s144 = ssub.s32 %s15, 1
        // Predicated region
        $region13: #{tpu_custom_call.1} parent=11 // pred_check
          %p145 = pneg %p74
        $region14: #{tpu_custom_call.1} parent=11 // pred_check_branch
          %147 = sbr.rel (%p145) target = $region16
        $region15: #{tpu_custom_call.1} parent=11 // pred_region
          _
        $region16: #{tpu_custom_call.1} parent=11 // pred_fallthru
          _
      $region12: #{tpu_custom_call.1} parent=5 // pred_fallthru
        _
      %p148 = scmp.lt.s32.totalorder %s15, 4
      // Predicated region
      $region17: #{tpu_custom_call.1} parent=5 // pred_check
        %p149 = pneg %p148
      $region18: #{tpu_custom_call.1} parent=5 // pred_check_branch
        %151 = sbr.rel (%p149) target = $region20
      $region19: #{tpu_custom_call.1} parent=5 // pred_region
        // Predicated region
        $region21: #{tpu_custom_call.1} parent=19 // pred_check
          %p152 = pneg %p47
        $region22: #{tpu_custom_call.1} parent=19 // pred_check_branch
          %154 = sbr.rel (%p152) target = $region24
        $region23: #{tpu_custom_call.1} parent=19 // pred_region
          %p155 = scmp.lt.s32.totalorder %s22, 1
          %s156 = scalar_select %p155, %s22, 1
          %s157 = smul.addr %s156, 16
          %s158 = smul.addr %s157, 8
          %s159 = scalar_lea.vmem %s0, %s158
        $region24: #{tpu_custom_call.1} parent=19 // pred_fallthru
          _
        // Predicated region
        $region25: #{tpu_custom_call.1} parent=19 // pred_check
          %p160 = pneg %p96
        $region26: #{tpu_custom_call.1} parent=19 // pred_check_branch
          %162 = sbr.rel (%p160) target = $region28
        $region27: #{tpu_custom_call.1} parent=19 // pred_region
          %s163 = sand.u32 %s86, 1
          %s164 = scalar_lea.sflag [#allocation4], %s163
          %s165 = sand.u32 %s86, 1
          %s166 = smul.addr %s165, 256
          %s167 = scalar_lea.vmem [#allocation3], %s166
          %s168 = smul.u32 64, %s23
          %s170 = ssub.s32 4096, 4096
          %171 = vsyncadd %s164, %s170
          %s172 = smul.addr %s22, 128
          %s173 = sadd.s32 %s168, %s172
          %s174 = smul.addr %s173, 64
          %s175 = scalar_lea.hbm %s2, %s174
          %s176 = sshll.u32 %s167, 4
          %s177 = int_to_ptr.vmem [resolvable:$true] %s176
          %182 = dma.hbm_to_vmem [thread:$0]  %s175, 4096, %s177, %s164, 64, 64, 4
        $region28: #{tpu_custom_call.1} parent=19 // pred_fallthru
          _
      $region20: #{tpu_custom_call.1} parent=5 // pred_fallthru
        _
      %p183 = scmp.le.s32.totalorder 1, %s15
      %p184 = scmp.lt.s32.totalorder %s15, 5
      %p185 = pnand %p183, %p184
      %p186 = pneg %p185
      // Predicated region
      $region29: #{tpu_custom_call.1} parent=5 // pred_check
        _
      $region30: #{tpu_custom_call.1} parent=5 // pred_check_branch
        %188 = sbr.rel (%p185) target = $region32
      $region31: #{tpu_custom_call.1} parent=5 // pred_region
        %s189 = ssub.s32 %s15, 1
        %s190 = sand.u32 %s89, 1
        %s191 = scalar_lea.sflag [#allocation4], %s190
        %s192 = sand.u32 %s89, 1
        %s193 = smul.addr %s192, 256
        %s194 = scalar_lea.vmem [#allocation3], %s193
        // Predicated region
        $region33: #{tpu_custom_call.1} parent=31 // pred_check
          %p195 = pneg %p102
        $region34: #{tpu_custom_call.1} parent=31 // pred_check_branch
          %197 = sbr.rel (%p195) target = $region36
        $region35: #{tpu_custom_call.1} parent=31 // pred_region
          %198 = dma.done %s191, 4096
        $region36: #{tpu_custom_call.1} parent=31 // pred_fallthru
          _
        %p199 = scmp.lt.s32.totalorder %s24, 1
        %s200 = scalar_select %p199, %s24, 1
        %s201 = smul.addr %s200, 16
        %s202 = smul.addr %s201, 8
        %s203 = scalar_lea.vmem %s0, %s202
        %p204 = pneg %p53
        %p205 = pneg %p50
        %p206 = pneg %p74
        %p207 = pneg %p71
        %s208 = sand.u32 %s89, 1
        %s209 = scalar_lea.sflag [#allocation4], %s208
        %s210 = sand.u32 %s89, 1
        %s211 = smul.addr %s210, 256
        %s212 = scalar_lea.vmem [#allocation3], %s211
        %p213 = pneg %p102
        %p214 = pneg %p99
        %p215 = pneg %p130
        %p216 = pneg %p127
        %s217 = sand.u32 %s117, 1
        %s218 = scalar_lea.sflag [#allocation5], %s217
        %s219 = sand.u32 %s117, 1
        %s220 = smul.addr %s219, 512
        %s221 = scalar_lea.vmem [#allocation6], %s220
        %p222 = scmp.lt.s32.totalorder %s24, 1
        %s223 = scalar_select %p222, %s24, 1
        %s224 = smul.addr %s223, 16
        %s225 = smul.addr %s224, 8
        %s226 = scalar_lea.vmem %s0, %s225
        %s227 = smul.u32 64, %s25
        %s228 = smul.u32 64, %s25
        %p230 = scmp.eq.s32.totalorder %s25, 0
        // Predicated region
        $region37: #{tpu_custom_call.1} parent=31 // pred_check
          %p231 = pneg %p230
        $region38: #{tpu_custom_call.1} parent=31 // pred_check_branch
          %233 = sbr.rel (%p231) target = $region40
        $region39: #{tpu_custom_call.1} parent=31 // pred_region
          %v234 = vld [vmem:[%s1] sm:$0xff]
          %v235 = vld [vmem:[%s1 + $0x8] sm:$0xff]
          %v236 = vld [vmem:[%s1 + $0x10] sm:$0xff]
          %v237 = vld [vmem:[%s1 + $0x18] sm:$0xff]
          %v238 = vld [vmem:[%s1 + $0x20] sm:$0xff]
          %v239 = vld [vmem:[%s1 + $0x28] sm:$0xff]
          %v240 = vld [vmem:[%s1 + $0x30] sm:$0xff]
          %v241 = vld [vmem:[%s1 + $0x38] sm:$0xff]
          %v242 = vld [vmem:[%s1 + $0x40] sm:$0xff]
          %v243 = vld [vmem:[%s1 + $0x48] sm:$0xff]
          %v244 = vld [vmem:[%s1 + $0x50] sm:$0xff]
          %v245 = vld [vmem:[%s1 + $0x58] sm:$0xff]
          %v246 = vld [vmem:[%s1 + $0x60] sm:$0xff]
          %v247 = vld [vmem:[%s1 + $0x68] sm:$0xff]
          %v248 = vld [vmem:[%s1 + $0x70] sm:$0xff]
          %v249 = vld [vmem:[%s1 + $0x78] sm:$0xff]
          %v250 = vld [vmem:[%s226] sm:$0xff]
          %v251 = vld [vmem:[%s226 + $0x8] sm:$0xff]
          %v252 = vld [vmem:[%s226 + $0x10] sm:$0xff]
          %v253 = vld [vmem:[%s226 + $0x18] sm:$0xff]
          %v254 = vld [vmem:[%s226 + $0x20] sm:$0xff]
          %v255 = vld [vmem:[%s226 + $0x28] sm:$0xff]
          %v256 = vld [vmem:[%s226 + $0x30] sm:$0xff]
          %v257 = vld [vmem:[%s226 + $0x38] sm:$0xff]
          %v258 = vld [vmem:[%s226 + $0x40] sm:$0xff]
          %v259 = vld [vmem:[%s226 + $0x48] sm:$0xff]
          %v260 = vld [vmem:[%s226 + $0x50] sm:$0xff]
          %v261 = vld [vmem:[%s226 + $0x58] sm:$0xff]
          %v262 = vld [vmem:[%s226 + $0x60] sm:$0xff]
          %v263 = vld [vmem:[%s226 + $0x68] sm:$0xff]
          %v264 = vld [vmem:[%s226 + $0x70] sm:$0xff]
          %v265 = vld [vmem:[%s226 + $0x78] sm:$0xff]
          %267 = vset.pattern.permute.xlu0 0
          %268 = vperm.xlu0 %267, %v250
          %v269 = vpop.permute.xlu0 %268
          %272 = vset.pattern.permute.xlu0 0
          %273 = vperm.xlu0 %272, %v251
          %v274 = vpop.permute.xlu0 %273
          %277 = vset.pattern.permute.xlu0 0
          %278 = vperm.xlu0 %277, %v252
          %v279 = vpop.permute.xlu0 %278
          %282 = vset.pattern.permute.xlu0 0
          %283 = vperm.xlu0 %282, %v253
          %v284 = vpop.permute.xlu0 %283
          %287 = vset.pattern.permute.xlu0 0
          %288 = vperm.xlu0 %287, %v254
          %v289 = vpop.permute.xlu0 %288
          %292 = vset.pattern.permute.xlu0 0
          %293 = vperm.xlu0 %292, %v255
          %v294 = vpop.permute.xlu0 %293
          %297 = vset.pattern.permute.xlu0 0
          %298 = vperm.xlu0 %297, %v256
          %v299 = vpop.permute.xlu0 %298
          %302 = vset.pattern.permute.xlu0 0
          %303 = vperm.xlu0 %302, %v257
          %v304 = vpop.permute.xlu0 %303
          %307 = vset.pattern.permute.xlu0 0
          %308 = vperm.xlu0 %307, %v258
          %v309 = vpop.permute.xlu0 %308
          %312 = vset.pattern.permute.xlu0 0
          %313 = vperm.xlu0 %312, %v259
          %v314 = vpop.permute.xlu0 %313
          %317 = vset.pattern.permute.xlu0 0
          %318 = vperm.xlu0 %317, %v260
          %v319 = vpop.permute.xlu0 %318
          %322 = vset.pattern.permute.xlu0 0
          %323 = vperm.xlu0 %322, %v261
          %v324 = vpop.permute.xlu0 %323
          %327 = vset.pattern.permute.xlu0 0
          %328 = vperm.xlu0 %327, %v262
          %v329 = vpop.permute.xlu0 %328
          %332 = vset.pattern.permute.xlu0 0
          %333 = vperm.xlu0 %332, %v263
          %v334 = vpop.permute.xlu0 %333
          %337 = vset.pattern.permute.xlu0 0
          %338 = vperm.xlu0 %337, %v264
          %v339 = vpop.permute.xlu0 %338
          %342 = vset.pattern.permute.xlu0 0
          %343 = vperm.xlu0 %342, %v265
          %v344 = vpop.permute.xlu0 %343
          %v346 = vmul.f32 %v234, %v269
          %v347 = vmul.f32 %v235, %v274
          %v348 = vmul.f32 %v236, %v279
          %v349 = vmul.f32 %v237, %v284
          %v350 = vmul.f32 %v238, %v289
          %v351 = vmul.f32 %v239, %v294
          %v352 = vmul.f32 %v240, %v299
          %v353 = vmul.f32 %v241, %v304
          %v354 = vmul.f32 %v242, %v309
          %v355 = vmul.f32 %v243, %v314
          %v356 = vmul.f32 %v244, %v319
          %v357 = vmul.f32 %v245, %v324
          %v358 = vmul.f32 %v246, %v329
          %v359 = vmul.f32 %v247, %v334
          %v360 = vmul.f32 %v248, %v339
          %v361 = vmul.f32 %v249, %v344
          %v362 = vmul.f32 %v346, %v346
          %v363 = vmul.f32 %v347, %v347
          %v364 = vmul.f32 %v348, %v348
          %v365 = vmul.f32 %v349, %v349
          %v366 = vmul.f32 %v350, %v350
          %v367 = vmul.f32 %v351, %v351
          %v368 = vmul.f32 %v352, %v352
          %v369 = vmul.f32 %v353, %v353
          %v370 = vmul.f32 %v354, %v354
          %v371 = vmul.f32 %v355, %v355
          %v372 = vmul.f32 %v356, %v356
          %v373 = vmul.f32 %v357, %v357
          %v374 = vmul.f32 %v358, %v358
          %v375 = vmul.f32 %v359, %v359
          %v376 = vmul.f32 %v360, %v360
          %v377 = vmul.f32 %v361, %v361
          %v378 = vadd.f32 %v362, %v363
          %v379 = vadd.f32 %v378, %v364
          %v380 = vadd.f32 %v379, %v365
          %v381 = vadd.f32 %v380, %v366
          %v382 = vadd.f32 %v381, %v367
          %v383 = vadd.f32 %v382, %v368
          %v384 = vadd.f32 %v383, %v369
          %v385 = vadd.f32 %v384, %v370
          %v386 = vadd.f32 %v385, %v371
          %v387 = vadd.f32 %v386, %v372
          %v388 = vadd.f32 %v387, %v373
          %v389 = vadd.f32 %v388, %v374
          %v390 = vadd.f32 %v389, %v375
          %v391 = vadd.f32 %v390, %v376
          %v392 = vadd.f32 %v391, %v377
          %v393 = vrot.slane %v392, 4
          %v394 = vadd.f32 %v392, %v393
          %v395 = vrot.slane %v394, 2
          %v396 = vadd.f32 %v394, %v395
          %v397 = vrot.slane %v396, 1
          %v398 = vadd.f32 %v396, %v397
          %v399 = vadd.f32 %v398, 1e-08
          %v400 = vrsqrt.pop %v399
          %v401 = vmul.f32 %v346, %v400
          %v402 = vmul.f32 %v347, %v400
          %v403 = vmul.f32 %v348, %v400
          %v404 = vmul.f32 %v349, %v400
          %v405 = vmul.f32 %v350, %v400
          %v406 = vmul.f32 %v351, %v400
          %v407 = vmul.f32 %v352, %v400
          %v408 = vmul.f32 %v353, %v400
          %v409 = vmul.f32 %v354, %v400
          %v410 = vmul.f32 %v355, %v400
          %v411 = vmul.f32 %v356, %v400
          %v412 = vmul.f32 %v357, %v400
          %v413 = vmul.f32 %v358, %v400
          %v414 = vmul.f32 %v359, %v400
          %v415 = vmul.f32 %v360, %v400
          %v416 = vmul.f32 %v361, %v400
          %v417 = vpack.c.bf16 %v402, %v401
          %v418 = vpack.c.bf16 %v404, %v403
          %v419 = vpack.c.bf16 %v406, %v405
          %v420 = vpack.c.bf16 %v408, %v407
          %v421 = vpack.c.bf16 %v410, %v409
          %v422 = vpack.c.bf16 %v412, %v411
          %v423 = vpack.c.bf16 %v414, %v413
          %v424 = vpack.c.bf16 %v416, %v415
          %v433 = vunpack.c.l.b16 %v417
          %v434 = vunpack.c.h.b16 %v417
          %v435 = vunpack.c.l.b16 %v418
          %v436 = vunpack.c.h.b16 %v418
          %v437 = vunpack.c.l.b16 %v419
          %v438 = vunpack.c.h.b16 %v419
          %v439 = vunpack.c.l.b16 %v420
          %v440 = vunpack.c.h.b16 %v420
          %v441 = vunpack.c.l.b16 %v421
          %v442 = vunpack.c.h.b16 %v421
          %v443 = vunpack.c.l.b16 %v422
          %v444 = vunpack.c.h.b16 %v422
          %v445 = vunpack.c.l.b16 %v423
          %v446 = vunpack.c.h.b16 %v423
          %v447 = vunpack.c.l.b16 %v424
          %v448 = vunpack.c.h.b16 %v424
          %v449 = vpack.c.b16 %v433, %v433
          %v450 = vpack.c.b16 %v434, %v434
          %v451 = vpack.c.b16 %v435, %v435
          %v452 = vpack.c.b16 %v436, %v436
          %v453 = vpack.c.b16 %v437, %v437
          %v454 = vpack.c.b16 %v438, %v438
          %v455 = vpack.c.b16 %v439, %v439
          %v456 = vpack.c.b16 %v440, %v440
          %v457 = vpack.c.b16 %v441, %v441
          %v458 = vpack.c.b16 %v442, %v442
          %v459 = vpack.c.b16 %v443, %v443
          %v460 = vpack.c.b16 %v444, %v444
          %v461 = vpack.c.b16 %v445, %v445
          %v462 = vpack.c.b16 %v446, %v446
          %v463 = vpack.c.b16 %v447, %v447
          %v464 = vpack.c.b16 %v448, %v448
          %481 = vst [vmem:[#allocation2] sm:$0xf] %v449
          %482 = vst [vmem:[#allocation2 + $0x4] sm:$0xf] %v450
          %483 = vst [vmem:[#allocation2 + $0x8] sm:$0xf] %v451
          %484 = vst [vmem:[#allocation2 + $0xc] sm:$0xf] %v452
          %485 = vst [vmem:[#allocation2 + $0x10] sm:$0xf] %v453
          %486 = vst [vmem:[#allocation2 + $0x14] sm:$0xf] %v454
          %487 = vst [vmem:[#allocation2 + $0x18] sm:$0xf] %v455
          %488 = vst [vmem:[#allocation2 + $0x1c] sm:$0xf] %v456
          %489 = vst [vmem:[#allocation2 + $0x20] sm:$0xf] %v457
          %490 = vst [vmem:[#allocation2 + $0x24] sm:$0xf] %v458
          %491 = vst [vmem:[#allocation2 + $0x28] sm:$0xf] %v459
          %492 = vst [vmem:[#allocation2 + $0x2c] sm:$0xf] %v460
          %493 = vst [vmem:[#allocation2 + $0x30] sm:$0xf] %v461
          %494 = vst [vmem:[#allocation2 + $0x34] sm:$0xf] %v462
          %495 = vst [vmem:[#allocation2 + $0x38] sm:$0xf] %v463
          %496 = vst [vmem:[#allocation2 + $0x3c] sm:$0xf] %v464
        $region40: #{tpu_custom_call.1} parent=31 // pred_fallthru
          _
        %v497 = vld [vmem:[%s194] sm:$0xf]
        %v498 = vld [vmem:[%s194 + $0x4] sm:$0xf]
        %v499 = vld [vmem:[%s194 + $0x8] sm:$0xf]
        %v500 = vld [vmem:[%s194 + $0xc] sm:$0xf]
        %v501 = vld [vmem:[%s194 + $0x10] sm:$0xf]
        %v502 = vld [vmem:[%s194 + $0x14] sm:$0xf]
        %v503 = vld [vmem:[%s194 + $0x18] sm:$0xf]
        %v504 = vld [vmem:[%s194 + $0x1c] sm:$0xf]
        %v505 = vld [vmem:[%s194 + $0x20] sm:$0xf]
        %v506 = vld [vmem:[%s194 + $0x24] sm:$0xf]
        %v507 = vld [vmem:[%s194 + $0x28] sm:$0xf]
        %v508 = vld [vmem:[%s194 + $0x2c] sm:$0xf]
        %v509 = vld [vmem:[%s194 + $0x30] sm:$0xf]
        %v510 = vld [vmem:[%s194 + $0x34] sm:$0xf]
        %v511 = vld [vmem:[%s194 + $0x38] sm:$0xf]
        %v512 = vld [vmem:[%s194 + $0x3c] sm:$0xf]
        %v513 = vld [vmem:[%s194 + $0x40] sm:$0xf]
        %v514 = vld [vmem:[%s194 + $0x44] sm:$0xf]
        %v515 = vld [vmem:[%s194 + $0x48] sm:$0xf]
        %v516 = vld [vmem:[%s194 + $0x4c] sm:$0xf]
        %v517 = vld [vmem:[%s194 + $0x50] sm:$0xf]
        %v518 = vld [vmem:[%s194 + $0x54] sm:$0xf]
        %v519 = vld [vmem:[%s194 + $0x58] sm:$0xf]
        %v520 = vld [vmem:[%s194 + $0x5c] sm:$0xf]
        %v521 = vld [vmem:[%s194 + $0x60] sm:$0xf]
        %v522 = vld [vmem:[%s194 + $0x64] sm:$0xf]
        %v523 = vld [vmem:[%s194 + $0x68] sm:$0xf]
        %v524 = vld [vmem:[%s194 + $0x6c] sm:$0xf]
        %v525 = vld [vmem:[%s194 + $0x70] sm:$0xf]
        %v526 = vld [vmem:[%s194 + $0x74] sm:$0xf]
        %v527 = vld [vmem:[%s194 + $0x78] sm:$0xf]
        %v528 = vld [vmem:[%s194 + $0x7c] sm:$0xf]
        %v529 = vld [vmem:[%s194 + $0x80] sm:$0xf]
        %v530 = vld [vmem:[%s194 + $0x84] sm:$0xf]
        %v531 = vld [vmem:[%s194 + $0x88] sm:$0xf]
        %v532 = vld [vmem:[%s194 + $0x8c] sm:$0xf]
        %v533 = vld [vmem:[%s194 + $0x90] sm:$0xf]
        %v534 = vld [vmem:[%s194 + $0x94] sm:$0xf]
        %v535 = vld [vmem:[%s194 + $0x98] sm:$0xf]
        %v536 = vld [vmem:[%s194 + $0x9c] sm:$0xf]
        %v537 = vld [vmem:[%s194 + $0xa0] sm:$0xf]
        %v538 = vld [vmem:[%s194 + $0xa4] sm:$0xf]
        %v539 = vld [vmem:[%s194 + $0xa8] sm:$0xf]
        %v540 = vld [vmem:[%s194 + $0xac] sm:$0xf]
        %v541 = vld [vmem:[%s194 + $0xb0] sm:$0xf]
        %v542 = vld [vmem:[%s194 + $0xb4] sm:$0xf]
        %v543 = vld [vmem:[%s194 + $0xb8] sm:$0xf]
        %v544 = vld [vmem:[%s194 + $0xbc] sm:$0xf]
        %v545 = vld [vmem:[%s194 + $0xc0] sm:$0xf]
        %v546 = vld [vmem:[%s194 + $0xc4] sm:$0xf]
        %v547 = vld [vmem:[%s194 + $0xc8] sm:$0xf]
        %v548 = vld [vmem:[%s194 + $0xcc] sm:$0xf]
        %v549 = vld [vmem:[%s194 + $0xd0] sm:$0xf]
        %v550 = vld [vmem:[%s194 + $0xd4] sm:$0xf]
        %v551 = vld [vmem:[%s194 + $0xd8] sm:$0xf]
        %v552 = vld [vmem:[%s194 + $0xdc] sm:$0xf]
        %v553 = vld [vmem:[%s194 + $0xe0] sm:$0xf]
        %v554 = vld [vmem:[%s194 + $0xe4] sm:$0xf]
        %v555 = vld [vmem:[%s194 + $0xe8] sm:$0xf]
        %v556 = vld [vmem:[%s194 + $0xec] sm:$0xf]
        %v557 = vld [vmem:[%s194 + $0xf0] sm:$0xf]
        %v558 = vld [vmem:[%s194 + $0xf4] sm:$0xf]
        %v559 = vld [vmem:[%s194 + $0xf8] sm:$0xf]
        %v560 = vld [vmem:[%s194 + $0xfc] sm:$0xf]
        %v561 = vld [vmem:[#allocation2] sm:$0xf]
        %v562 = vld [vmem:[#allocation2 + $0x4] sm:$0xf]
        %v563 = vld [vmem:[#allocation2 + $0x8] sm:$0xf]
        %v564 = vld [vmem:[#allocation2 + $0xc] sm:$0xf]
        %v565 = vld [vmem:[#allocation2 + $0x10] sm:$0xf]
        %v566 = vld [vmem:[#allocation2 + $0x14] sm:$0xf]
        %v567 = vld [vmem:[#allocation2 + $0x18] sm:$0xf]
        %v568 = vld [vmem:[#allocation2 + $0x1c] sm:$0xf]
        %v569 = vld [vmem:[#allocation2 + $0x20] sm:$0xf]
        %v570 = vld [vmem:[#allocation2 + $0x24] sm:$0xf]
        %v571 = vld [vmem:[#allocation2 + $0x28] sm:$0xf]
        %v572 = vld [vmem:[#allocation2 + $0x2c] sm:$0xf]
        %v573 = vld [vmem:[#allocation2 + $0x30] sm:$0xf]
        %v574 = vld [vmem:[#allocation2 + $0x34] sm:$0xf]
        %v575 = vld [vmem:[#allocation2 + $0x38] sm:$0xf]
        %v576 = vld [vmem:[#allocation2 + $0x3c] sm:$0xf]
        %v641 = vunpack.c.l.b16 %v497
        %v642 = vunpack.c.l.b16 %v498
        %v643 = vunpack.c.l.b16 %v499
        %v644 = vunpack.c.l.b16 %v500
        %v645 = vunpack.c.l.b16 %v501
        %v646 = vunpack.c.l.b16 %v502
        %v647 = vunpack.c.l.b16 %v503
        %v648 = vunpack.c.l.b16 %v504
        %v649 = vunpack.c.l.b16 %v505
        %v650 = vunpack.c.l.b16 %v506
        %v651 = vunpack.c.l.b16 %v507
        %v652 = vunpack.c.l.b16 %v508
        %v653 = vunpack.c.l.b16 %v509
        %v654 = vunpack.c.l.b16 %v510
        %v655 = vunpack.c.l.b16 %v511
        %v656 = vunpack.c.l.b16 %v512
        %v657 = vunpack.c.l.b16 %v513
        %v658 = vunpack.c.l.b16 %v514
        %v659 = vunpack.c.l.b16 %v515
        %v660 = vunpack.c.l.b16 %v516
        %v661 = vunpack.c.l.b16 %v517
        %v662 = vunpack.c.l.b16 %v518
        %v663 = vunpack.c.l.b16 %v519
        %v664 = vunpack.c.l.b16 %v520
        %v665 = vunpack.c.l.b16 %v521
        %v666 = vunpack.c.l.b16 %v522
        %v667 = vunpack.c.l.b16 %v523
        %v668 = vunpack.c.l.b16 %v524
        %v669 = vunpack.c.l.b16 %v525
        %v670 = vunpack.c.l.b16 %v526
        %v671 = vunpack.c.l.b16 %v527
        %v672 = vunpack.c.l.b16 %v528
        %v673 = vunpack.c.l.b16 %v529
        %v674 = vunpack.c.l.b16 %v530
        %v675 = vunpack.c.l.b16 %v531
        %v676 = vunpack.c.l.b16 %v532
        %v677 = vunpack.c.l.b16 %v533
        %v678 = vunpack.c.l.b16 %v534
        %v679 = vunpack.c.l.b16 %v535
        %v680 = vunpack.c.l.b16 %v536
        %v681 = vunpack.c.l.b16 %v537
        %v682 = vunpack.c.l.b16 %v538
        %v683 = vunpack.c.l.b16 %v539
        %v684 = vunpack.c.l.b16 %v540
        %v685 = vunpack.c.l.b16 %v541
        %v686 = vunpack.c.l.b16 %v542
        %v687 = vunpack.c.l.b16 %v543
        %v688 = vunpack.c.l.b16 %v544
        %v689 = vunpack.c.l.b16 %v545
        %v690 = vunpack.c.l.b16 %v546
        %v691 = vunpack.c.l.b16 %v547
        %v692 = vunpack.c.l.b16 %v548
        %v693 = vunpack.c.l.b16 %v549
        %v694 = vunpack.c.l.b16 %v550
        %v695 = vunpack.c.l.b16 %v551
        %v696 = vunpack.c.l.b16 %v552
        %v697 = vunpack.c.l.b16 %v553
        %v698 = vunpack.c.l.b16 %v554
        %v699 = vunpack.c.l.b16 %v555
        %v700 = vunpack.c.l.b16 %v556
        %v701 = vunpack.c.l.b16 %v557
        %v702 = vunpack.c.l.b16 %v558
        %v703 = vunpack.c.l.b16 %v559
        %v704 = vunpack.c.l.b16 %v560
        %v705 = vpack.c.b16 %v642, %v641
        %v706 = vpack.c.b16 %v644, %v643
        %v707 = vpack.c.b16 %v646, %v645
        %v708 = vpack.c.b16 %v648, %v647
        %v709 = vpack.c.b16 %v650, %v649
        %v710 = vpack.c.b16 %v652, %v651
        %v711 = vpack.c.b16 %v654, %v653
        %v712 = vpack.c.b16 %v656, %v655
        %v713 = vpack.c.b16 %v658, %v657
        %v714 = vpack.c.b16 %v660, %v659
        %v715 = vpack.c.b16 %v662, %v661
        %v716 = vpack.c.b16 %v664, %v663
        %v717 = vpack.c.b16 %v666, %v665
        %v718 = vpack.c.b16 %v668, %v667
        %v719 = vpack.c.b16 %v670, %v669
        %v720 = vpack.c.b16 %v672, %v671
        %v721 = vpack.c.b16 %v674, %v673
        %v722 = vpack.c.b16 %v676, %v675
        %v723 = vpack.c.b16 %v678, %v677
        %v724 = vpack.c.b16 %v680, %v679
        %v725 = vpack.c.b16 %v682, %v681
        %v726 = vpack.c.b16 %v684, %v683
        %v727 = vpack.c.b16 %v686, %v685
        %v728 = vpack.c.b16 %v688, %v687
        %v729 = vpack.c.b16 %v690, %v689
        %v730 = vpack.c.b16 %v692, %v691
        %v731 = vpack.c.b16 %v694, %v693
        %v732 = vpack.c.b16 %v696, %v695
        %v733 = vpack.c.b16 %v698, %v697
        %v734 = vpack.c.b16 %v700, %v699
        %v735 = vpack.c.b16 %v702, %v701
        %v736 = vpack.c.b16 %v704, %v703
        %v785 = vunpack.c.l.b16 %v561
        %v786 = vunpack.c.l.b16 %v562
        %v787 = vunpack.c.l.b16 %v563
        %v788 = vunpack.c.l.b16 %v564
        %v789 = vunpack.c.l.b16 %v565
        %v790 = vunpack.c.l.b16 %v566
        %v791 = vunpack.c.l.b16 %v567
        %v792 = vunpack.c.l.b16 %v568
        %v793 = vunpack.c.l.b16 %v569
        %v794 = vunpack.c.l.b16 %v570
        %v795 = vunpack.c.l.b16 %v571
        %v796 = vunpack.c.l.b16 %v572
        %v797 = vunpack.c.l.b16 %v573
        %v798 = vunpack.c.l.b16 %v574
        %v799 = vunpack.c.l.b16 %v575
        %v800 = vunpack.c.l.b16 %v576
        %v801 = vpack.c.b16 %v786, %v785
        %v802 = vpack.c.b16 %v788, %v787
        %v803 = vpack.c.b16 %v790, %v789
        %v804 = vpack.c.b16 %v792, %v791
        %v805 = vpack.c.b16 %v794, %v793
        %v806 = vpack.c.b16 %v796, %v795
        %v807 = vpack.c.b16 %v798, %v797
        %v808 = vpack.c.b16 %v800, %v799
        %817 = vmatprep.subr.bf16.mxu0 0
        %818 = vmatpush1.bf16.msra.mxu0 %v808
        %819 = vmatprep.subr.bf16.mxu0 0
        %820 = vmatpush1.bf16.msra.mxu0 %v807
        %821 = vmatprep.subr.bf16.mxu0 0
        %822 = vmatpush1.bf16.msra.mxu0 %v806
        %823 = vmatprep.subr.bf16.mxu0 0
        %824 = vmatpush1.bf16.msra.mxu0 %v805
        %825 = vmatprep.subr.bf16.mxu0 0
        %826 = vmatpush1.bf16.msra.mxu0 %v804
        %827 = vmatprep.subr.bf16.mxu0 0
        %828 = vmatpush1.bf16.msra.mxu0 %v803
        %829 = vmatprep.subr.bf16.mxu0 0
        %830 = vmatpush1.bf16.msra.mxu0 %v802
        %831 = vmatprep.subr.bf16.mxu0 0
        %832 = vmatpush1.bf16.msra.mxu0 %v801
        %833 = vmatprep.subr.bf16.mxu0 0
        %834 = vmatpush2.bf16.msra.mxu0 0
        %835 = vmatprep.subr.bf16.mxu0 0
        %836 = vmatpush2.bf16.msra.mxu0 0
        %837 = vmatprep.subr.bf16.mxu0 0
        %838 = vmatpush2.bf16.msra.mxu0 0
        %839 = vmatprep.subr.bf16.mxu0 0
        %840 = vmatpush2.bf16.msra.mxu0 0
        %841 = vmatprep.subr.bf16.mxu0 0
        %842 = vmatpush2.bf16.msra.mxu0 0
        %843 = vmatprep.subr.bf16.mxu0 0
        %844 = vmatpush2.bf16.msra.mxu0 0
        %845 = vmatprep.subr.bf16.mxu0 0
        %846 = vmatpush2.bf16.msra.mxu0 0
        %847 = vmatprep.subr.bf16.mxu0 0
        %848 = vmatpush2.bf16.msra.mxu0 0
        %849 = vmatprep.mubr.bf16.mxu0 0
        %850 = vmatmul.mubr.bf16.gmra.mxu0 %v705
        %v851 = vpop.f32.mrf.mxu0
        %v852 = vadd.f32 0.0, %v851
        %v853 = vpop.f32.mrf.mxu0
        %v854 = vpop.f32.mrf.mxu0
        %v855 = vadd.f32 0.0, %v854
        %v856 = vpop.f32.mrf.mxu0
        %857 = vmatprep.mubr.bf16.mxu0 0
        %858 = vmatmul.mubr.bf16.gmra.mxu0 %v706
        %v859 = vpop.f32.mrf.mxu0
        %v860 = vadd.f32 0.0, %v859
        %v861 = vpop.f32.mrf.mxu0
        %v862 = vpop.f32.mrf.mxu0
        %v863 = vadd.f32 0.0, %v862
        %v864 = vpop.f32.mrf.mxu0
        %865 = vmatprep.mubr.bf16.mxu0 0
        %866 = vmatmul.mubr.bf16.gmra.mxu0 %v707
        %v867 = vpop.f32.mrf.mxu0
        %v868 = vadd.f32 0.0, %v867
        %v869 = vpop.f32.mrf.mxu0
        %v870 = vpop.f32.mrf.mxu0
        %v871 = vadd.f32 0.0, %v870
        %v872 = vpop.f32.mrf.mxu0
        %873 = vmatprep.mubr.bf16.mxu0 0
        %874 = vmatmul.mubr.bf16.gmra.mxu0 %v708
        %v875 = vpop.f32.mrf.mxu0
        %v876 = vadd.f32 0.0, %v875
        %v877 = vpop.f32.mrf.mxu0
        %v878 = vpop.f32.mrf.mxu0
        %v879 = vadd.f32 0.0, %v878
        %v880 = vpop.f32.mrf.mxu0
        %881 = vmatprep.mubr.bf16.mxu0 0
        %882 = vmatmul.mubr.bf16.gmra.mxu0 %v709
        %v883 = vpop.f32.mrf.mxu0
        %v884 = vadd.f32 0.0, %v883
        %v885 = vpop.f32.mrf.mxu0
        %v886 = vpop.f32.mrf.mxu0
        %v887 = vadd.f32 0.0, %v886
        %v888 = vpop.f32.mrf.mxu0
        %889 = vmatprep.mubr.bf16.mxu0 0
        %890 = vmatmul.mubr.bf16.gmra.mxu0 %v710
        %v891 = vpop.f32.mrf.mxu0
        %v892 = vadd.f32 0.0, %v891
        %v893 = vpop.f32.mrf.mxu0
        %v894 = vpop.f32.mrf.mxu0
        %v895 = vadd.f32 0.0, %v894
        %v896 = vpop.f32.mrf.mxu0
        %897 = vmatprep.mubr.bf16.mxu0 0
        %898 = vmatmul.mubr.bf16.gmra.mxu0 %v711
        %v899 = vpop.f32.mrf.mxu0
        %v900 = vadd.f32 0.0, %v899
        %v901 = vpop.f32.mrf.mxu0
        %v902 = vpop.f32.mrf.mxu0
        %v903 = vadd.f32 0.0, %v902
        %v904 = vpop.f32.mrf.mxu0
        %905 = vmatprep.mubr.bf16.mxu0 0
        %906 = vmatmul.mubr.bf16.gmra.mxu0 %v712
        %v907 = vpop.f32.mrf.mxu0
        %v908 = vadd.f32 0.0, %v907
        %v909 = vpop.f32.mrf.mxu0
        %v910 = vpop.f32.mrf.mxu0
        %v911 = vadd.f32 0.0, %v910
        %v912 = vpop.f32.mrf.mxu0
        %913 = vmatprep.mubr.bf16.mxu0 0
        %914 = vmatmul.mubr.bf16.gmra.mxu0 %v713
        %v915 = vpop.f32.mrf.mxu0
        %v916 = vadd.f32 0.0, %v915
        %v917 = vpop.f32.mrf.mxu0
        %v918 = vpop.f32.mrf.mxu0
        %v919 = vadd.f32 0.0, %v918
        %v920 = vpop.f32.mrf.mxu0
        %921 = vmatprep.mubr.bf16.mxu0 0
        %922 = vmatmul.mubr.bf16.gmra.mxu0 %v714
        %v923 = vpop.f32.mrf.mxu0
        %v924 = vadd.f32 0.0, %v923
        %v925 = vpop.f32.mrf.mxu0
        %v926 = vpop.f32.mrf.mxu0
        %v927 = vadd.f32 0.0, %v926
        %v928 = vpop.f32.mrf.mxu0
        %929 = vmatprep.mubr.bf16.mxu0 0
        %930 = vmatmul.mubr.bf16.gmra.mxu0 %v715
        %v931 = vpop.f32.mrf.mxu0
        %v932 = vadd.f32 0.0, %v931
        %v933 = vpop.f32.mrf.mxu0
        %v934 = vpop.f32.mrf.mxu0
        %v935 = vadd.f32 0.0, %v934
        %v936 = vpop.f32.mrf.mxu0
        %937 = vmatprep.mubr.bf16.mxu0 0
        %938 = vmatmul.mubr.bf16.gmra.mxu0 %v716
        %v939 = vpop.f32.mrf.mxu0
        %v940 = vadd.f32 0.0, %v939
        %v941 = vpop.f32.mrf.mxu0
        %v942 = vpop.f32.mrf.mxu0
        %v943 = vadd.f32 0.0, %v942
        %v944 = vpop.f32.mrf.mxu0
        %945 = vmatprep.mubr.bf16.mxu0 0
        %946 = vmatmul.mubr.bf16.gmra.mxu0 %v717
        %v947 = vpop.f32.mrf.mxu0
        %v948 = vadd.f32 0.0, %v947
        %v949 = vpop.f32.mrf.mxu0
        %v950 = vpop.f32.mrf.mxu0
        %v951 = vadd.f32 0.0, %v950
        %v952 = vpop.f32.mrf.mxu0
        %953 = vmatprep.mubr.bf16.mxu0 0
        %954 = vmatmul.mubr.bf16.gmra.mxu0 %v718
        %v955 = vpop.f32.mrf.mxu0
        %v956 = vadd.f32 0.0, %v955
        %v957 = vpop.f32.mrf.mxu0
        %v958 = vpop.f32.mrf.mxu0
        %v959 = vadd.f32 0.0, %v958
        %v960 = vpop.f32.mrf.mxu0
        %961 = vmatprep.mubr.bf16.mxu0 0
        %962 = vmatmul.mubr.bf16.gmra.mxu0 %v719
        %v963 = vpop.f32.mrf.mxu0
        %v964 = vadd.f32 0.0, %v963
        %v965 = vpop.f32.mrf.mxu0
        %v966 = vpop.f32.mrf.mxu0
        %v967 = vadd.f32 0.0, %v966
        %v968 = vpop.f32.mrf.mxu0
        %969 = vmatprep.mubr.bf16.mxu0 0
        %970 = vmatmul.mubr.bf16.gmra.mxu0 %v720
        %v971 = vpop.f32.mrf.mxu0
        %v972 = vadd.f32 0.0, %v971
        %v973 = vpop.f32.mrf.mxu0
        %v974 = vpop.f32.mrf.mxu0
        %v975 = vadd.f32 0.0, %v974
        %v976 = vpop.f32.mrf.mxu0
        %977 = vmatprep.mubr.bf16.mxu0 0
        %978 = vmatmul.mubr.bf16.gmra.mxu0 %v721
        %v979 = vpop.f32.mrf.mxu0
        %v980 = vadd.f32 0.0, %v979
        %v981 = vpop.f32.mrf.mxu0
        %v982 = vpop.f32.mrf.mxu0
        %v983 = vadd.f32 0.0, %v982
        %v984 = vpop.f32.mrf.mxu0
        %985 = vmatprep.mubr.bf16.mxu0 0
        %986 = vmatmul.mubr.bf16.gmra.mxu0 %v722
        %v987 = vpop.f32.mrf.mxu0
        %v988 = vadd.f32 0.0, %v987
        %v989 = vpop.f32.mrf.mxu0
        %v990 = vpop.f32.mrf.mxu0
        %v991 = vadd.f32 0.0, %v990
        %v992 = vpop.f32.mrf.mxu0
        %993 = vmatprep.mubr.bf16.mxu0 0
        %994 = vmatmul.mubr.bf16.gmra.mxu0 %v723
        %v995 = vpop.f32.mrf.mxu0
        %v996 = vadd.f32 0.0, %v995
        %v997 = vpop.f32.mrf.mxu0
        %v998 = vpop.f32.mrf.mxu0
        %v999 = vadd.f32 0.0, %v998
        %v1000 = vpop.f32.mrf.mxu0
        %1001 = vmatprep.mubr.bf16.mxu0 0
        %1002 = vmatmul.mubr.bf16.gmra.mxu0 %v724
        %v1003 = vpop.f32.mrf.mxu0
        %v1004 = vadd.f32 0.0, %v1003
        %v1005 = vpop.f32.mrf.mxu0
        %v1006 = vpop.f32.mrf.mxu0
        %v1007 = vadd.f32 0.0, %v1006
        %v1008 = vpop.f32.mrf.mxu0
        %1009 = vmatprep.mubr.bf16.mxu0 0
        %1010 = vmatmul.mubr.bf16.gmra.mxu0 %v725
        %v1011 = vpop.f32.mrf.mxu0
        %v1012 = vadd.f32 0.0, %v1011
        %v1013 = vpop.f32.mrf.mxu0
        %v1014 = vpop.f32.mrf.mxu0
        %v1015 = vadd.f32 0.0, %v1014
        %v1016 = vpop.f32.mrf.mxu0
        %1017 = vmatprep.mubr.bf16.mxu0 0
        %1018 = vmatmul.mubr.bf16.gmra.mxu0 %v726
        %v1019 = vpop.f32.mrf.mxu0
        %v1020 = vadd.f32 0.0, %v1019
        %v1021 = vpop.f32.mrf.mxu0
        %v1022 = vpop.f32.mrf.mxu0
        %v1023 = vadd.f32 0.0, %v1022
        %v1024 = vpop.f32.mrf.mxu0
        %1025 = vmatprep.mubr.bf16.mxu0 0
        %1026 = vmatmul.mubr.bf16.gmra.mxu0 %v727
        %v1027 = vpop.f32.mrf.mxu0
        %v1028 = vadd.f32 0.0, %v1027
        %v1029 = vpop.f32.mrf.mxu0
        %v1030 = vpop.f32.mrf.mxu0
        %v1031 = vadd.f32 0.0, %v1030
        %v1032 = vpop.f32.mrf.mxu0
        %1033 = vmatprep.mubr.bf16.mxu0 0
        %1034 = vmatmul.mubr.bf16.gmra.mxu0 %v728
        %v1035 = vpop.f32.mrf.mxu0
        %v1036 = vadd.f32 0.0, %v1035
        %v1037 = vpop.f32.mrf.mxu0
        %v1038 = vpop.f32.mrf.mxu0
        %v1039 = vadd.f32 0.0, %v1038
        %v1040 = vpop.f32.mrf.mxu0
        %1041 = vmatprep.mubr.bf16.mxu0 0
        %1042 = vmatmul.mubr.bf16.gmra.mxu0 %v729
        %v1043 = vpop.f32.mrf.mxu0
        %v1044 = vadd.f32 0.0, %v1043
        %v1045 = vpop.f32.mrf.mxu0
        %v1046 = vpop.f32.mrf.mxu0
        %v1047 = vadd.f32 0.0, %v1046
        %v1048 = vpop.f32.mrf.mxu0
        %1049 = vmatprep.mubr.bf16.mxu0 0
        %1050 = vmatmul.mubr.bf16.gmra.mxu0 %v730
        %v1051 = vpop.f32.mrf.mxu0
        %v1052 = vadd.f32 0.0, %v1051
        %v1053 = vpop.f32.mrf.mxu0
        %v1054 = vpop.f32.mrf.mxu0
        %v1055 = vadd.f32 0.0, %v1054
        %v1056 = vpop.f32.mrf.mxu0
        %1057 = vmatprep.mubr.bf16.mxu0 0
        %1058 = vmatmul.mubr.bf16.gmra.mxu0 %v731
        %v1059 = vpop.f32.mrf.mxu0
        %v1060 = vadd.f32 0.0, %v1059
        %v1061 = vpop.f32.mrf.mxu0
        %v1062 = vpop.f32.mrf.mxu0
        %v1063 = vadd.f32 0.0, %v1062
        %v1064 = vpop.f32.mrf.mxu0
        %1065 = vmatprep.mubr.bf16.mxu0 0
        %1066 = vmatmul.mubr.bf16.gmra.mxu0 %v732
        %v1067 = vpop.f32.mrf.mxu0
        %v1068 = vadd.f32 0.0, %v1067
        %v1069 = vpop.f32.mrf.mxu0
        %v1070 = vpop.f32.mrf.mxu0
        %v1071 = vadd.f32 0.0, %v1070
        %v1072 = vpop.f32.mrf.mxu0
        %1073 = vmatprep.mubr.bf16.mxu0 0
        %1074 = vmatmul.mubr.bf16.gmra.mxu0 %v733
        %v1075 = vpop.f32.mrf.mxu0
        %v1076 = vadd.f32 0.0, %v1075
        %v1077 = vpop.f32.mrf.mxu0
        %v1078 = vpop.f32.mrf.mxu0
        %v1079 = vadd.f32 0.0, %v1078
        %v1080 = vpop.f32.mrf.mxu0
        %1081 = vmatprep.mubr.bf16.mxu0 0
        %1082 = vmatmul.mubr.bf16.gmra.mxu0 %v734
        %v1083 = vpop.f32.mrf.mxu0
        %v1084 = vadd.f32 0.0, %v1083
        %v1085 = vpop.f32.mrf.mxu0
        %v1086 = vpop.f32.mrf.mxu0
        %v1087 = vadd.f32 0.0, %v1086
        %v1088 = vpop.f32.mrf.mxu0
        %1089 = vmatprep.mubr.bf16.mxu0 0
        %1090 = vmatmul.mubr.bf16.gmra.mxu0 %v735
        %v1091 = vpop.f32.mrf.mxu0
        %v1092 = vadd.f32 0.0, %v1091
        %v1093 = vpop.f32.mrf.mxu0
        %v1094 = vpop.f32.mrf.mxu0
        %v1095 = vadd.f32 0.0, %v1094
        %v1096 = vpop.f32.mrf.mxu0
        %1097 = vmatprep.mubr.bf16.mxu0 0
        %1098 = vmatmul.mubr.bf16.gmra.mxu0 %v736
        %v1099 = vpop.f32.mrf.mxu0
        %v1100 = vadd.f32 0.0, %v1099
        %v1101 = vpop.f32.mrf.mxu0
        %v1102 = vpop.f32.mrf.mxu0
        %v1103 = vadd.f32 0.0, %v1102
        %v1104 = vpop.f32.mrf.mxu0
        %1105 = vdwg.mxu0
        %1106 = vst [vmem:[%s221] sm:$0xff] %v852
        %1107 = vst [vmem:[%s221 + $0x8] sm:$0xff] %v855
        %1108 = vst [vmem:[%s221 + $0x10] sm:$0xff] %v860
        %1109 = vst [vmem:[%s221 + $0x18] sm:$0xff] %v863
        %1110 = vst [vmem:[%s221 + $0x20] sm:$0xff] %v868
        %1111 = vst [vmem:[%s221 + $0x28] sm:$0xff] %v871
        %1112 = vst [vmem:[%s221 + $0x30] sm:$0xff] %v876
        %1113 = vst [vmem:[%s221 + $0x38] sm:$0xff] %v879
        %1114 = vst [vmem:[%s221 + $0x40] sm:$0xff] %v884
        %1115 = vst [vmem:[%s221 + $0x48] sm:$0xff] %v887
        %1116 = vst [vmem:[%s221 + $0x50] sm:$0xff] %v892
        %1117 = vst [vmem:[%s221 + $0x58] sm:$0xff] %v895
        %1118 = vst [vmem:[%s221 + $0x60] sm:$0xff] %v900
        %1119 = vst [vmem:[%s221 + $0x68] sm:$0xff] %v903
        %1120 = vst [vmem:[%s221 + $0x70] sm:$0xff] %v908
        %1121 = vst [vmem:[%s221 + $0x78] sm:$0xff] %v911
        %1122 = vst [vmem:[%s221 + $0x80] sm:$0xff] %v916
        %1123 = vst [vmem:[%s221 + $0x88] sm:$0xff] %v919
        %1124 = vst [vmem:[%s221 + $0x90] sm:$0xff] %v924
        %1125 = vst [vmem:[%s221 + $0x98] sm:$0xff] %v927
        %1126 = vst [vmem:[%s221 + $0xa0] sm:$0xff] %v932
        %1127 = vst [vmem:[%s221 + $0xa8] sm:$0xff] %v935
        %1128 = vst [vmem:[%s221 + $0xb0] sm:$0xff] %v940
        %1129 = vst [vmem:[%s221 + $0xb8] sm:$0xff] %v943
        %1130 = vst [vmem:[%s221 + $0xc0] sm:$0xff] %v948
        %1131 = vst [vmem:[%s221 + $0xc8] sm:$0xff] %v951
        %1132 = vst [vmem:[%s221 + $0xd0] sm:$0xff] %v956
        %1133 = vst [vmem:[%s221 + $0xd8] sm:$0xff] %v959
        %1134 = vst [vmem:[%s221 + $0xe0] sm:$0xff] %v964
        %1135 = vst [vmem:[%s221 + $0xe8] sm:$0xff] %v967
        %1136 = vst [vmem:[%s221 + $0xf0] sm:$0xff] %v972
        %1137 = vst [vmem:[%s221 + $0xf8] sm:$0xff] %v975
        %1138 = vst [vmem:[%s221 + $0x100] sm:$0xff] %v980
        %1139 = vst [vmem:[%s221 + $0x108] sm:$0xff] %v983
        %1140 = vst [vmem:[%s221 + $0x110] sm:$0xff] %v988
        %1141 = vst [vmem:[%s221 + $0x118] sm:$0xff] %v991
        %1142 = vst [vmem:[%s221 + $0x120] sm:$0xff] %v996
        %1143 = vst [vmem:[%s221 + $0x128] sm:$0xff] %v999
        %1144 = vst [vmem:[%s221 + $0x130] sm:$0xff] %v1004
        %1145 = vst [vmem:[%s221 + $0x138] sm:$0xff] %v1007
        %1146 = vst [vmem:[%s221 + $0x140] sm:$0xff] %v1012
        %1147 = vst [vmem:[%s221 + $0x148] sm:$0xff] %v1015
        %1148 = vst [vmem:[%s221 + $0x150] sm:$0xff] %v1020
        %1149 = vst [vmem:[%s221 + $0x158] sm:$0xff] %v1023
        %1150 = vst [vmem:[%s221 + $0x160] sm:$0xff] %v1028
        %1151 = vst [vmem:[%s221 + $0x168] sm:$0xff] %v1031
        %1152 = vst [vmem:[%s221 + $0x170] sm:$0xff] %v1036
        %1153 = vst [vmem:[%s221 + $0x178] sm:$0xff] %v1039
        %1154 = vst [vmem:[%s221 + $0x180] sm:$0xff] %v1044
        %1155 = vst [vmem:[%s221 + $0x188] sm:$0xff] %v1047
        %1156 = vst [vmem:[%s221 + $0x190] sm:$0xff] %v1052
        %1157 = vst [vmem:[%s221 + $0x198] sm:$0xff] %v1055
        %1158 = vst [vmem:[%s221 + $0x1a0] sm:$0xff] %v1060
        %1159 = vst [vmem:[%s221 + $0x1a8] sm:$0xff] %v1063
        %1160 = vst [vmem:[%s221 + $0x1b0] sm:$0xff] %v1068
        %1161 = vst [vmem:[%s221 + $0x1b8] sm:$0xff] %v1071
        %1162 = vst [vmem:[%s221 + $0x1c0] sm:$0xff] %v1076
        %1163 = vst [vmem:[%s221 + $0x1c8] sm:$0xff] %v1079
        %1164 = vst [vmem:[%s221 + $0x1d0] sm:$0xff] %v1084
        %1165 = vst [vmem:[%s221 + $0x1d8] sm:$0xff] %v1087
        %1166 = vst [vmem:[%s221 + $0x1e0] sm:$0xff] %v1092
        %1167 = vst [vmem:[%s221 + $0x1e8] sm:$0xff] %v1095
        %1168 = vst [vmem:[%s221 + $0x1f0] sm:$0xff] %v1100
        %1169 = vst [vmem:[%s221 + $0x1f8] sm:$0xff] %v1103
        %s1170 = sand.u32 %s117, 1
        %s1171 = scalar_lea.sflag [#allocation5], %s1170
        %s1172 = sand.u32 %s117, 1
        %s1173 = smul.addr %s1172, 512
        %s1174 = scalar_lea.vmem [#allocation6], %s1173
        // Predicated region
        $region41: #{tpu_custom_call.1} parent=31 // pred_check
          %p1175 = pneg %p127
        $region42: #{tpu_custom_call.1} parent=31 // pred_check_branch
          %1177 = sbr.rel (%p1175) target = $region44
        $region43: #{tpu_custom_call.1} parent=31 // pred_region
          %s1178 = smul.u32 64, %s25
          %s1180 = ssub.s32 8192, 8192
          %1181 = vsyncadd %s1171, %s1180
          %s1182 = smul.addr %s24, 128
          %s1183 = sadd.s32 %s1178, %s1182
          %s1184 = smul.addr %s1183, 128
          %s1185 = scalar_lea.hbm %s3, %s1184
          %s1186 = sshll.u32 %s1174, 4
          %s1187 = int_to_ptr.vmem [resolvable:$true] %s1186
          %1192 = dma.vmem_to_hbm [thread:$0]  %s1187, 8192, %s1185, %s1171, 128, 128, 8
        $region44: #{tpu_custom_call.1} parent=31 // pred_fallthru
          _
      $region32: #{tpu_custom_call.1} parent=5 // pred_fallthru
        _
      %p1193 = scmp.le.s32.totalorder 2, %s15
      // Predicated region
      $region45: #{tpu_custom_call.1} parent=5 // pred_check
        %p1194 = pneg %p1193
      $region46: #{tpu_custom_call.1} parent=5 // pred_check_branch
        %1196 = sbr.rel (%p1194) target = $region48
      $region47: #{tpu_custom_call.1} parent=5 // pred_region
        %s1197 = ssub.s32 %s15, 2
        // Predicated region
        $region49: #{tpu_custom_call.1} parent=47 // pred_check
          %p1198 = pneg %p133
        $region50: #{tpu_custom_call.1} parent=47 // pred_check_branch
          %1200 = sbr.rel (%p1198) target = $region52
        $region51: #{tpu_custom_call.1} parent=47 // pred_region
          %s1201 = sand.u32 %s118, 1
          %s1202 = scalar_lea.sflag [#allocation5], %s1201
          %s1203 = sand.u32 %s118, 1
          %s1204 = smul.addr %s1203, 512
          %s1205 = scalar_lea.vmem [#allocation6], %s1204
          %1206 = dma.done %s1202, 8192
        $region52: #{tpu_custom_call.1} parent=47 // pred_fallthru
          _
      $region48: #{tpu_custom_call.1} parent=5 // pred_fallthru
        _
    $region6: #{tpu_custom_call.1} parent=1 // loop_footer
      %s19 = sadd.s32 1, %s15
    $region7: #{tpu_custom_call.1} parent=1 // loop_footer_branch
      %14 = sbr.rel target = $region3
    $region8: #{tpu_custom_call.1} parent=1 // loop_exit
      _
    %1207 = vsyncpa [#allocation4], 1
    %s1208 = scalar_lea.sflag [#allocation4], 1
    %1209 = vsyncpa %s1208, 1
    %1210 = vsyncpa [#allocation5], 1
    %s1211 = scalar_lea.sflag [#allocation5], 1
    %1212 = vsyncpa %s1211, 1

// kernel: tpu_custom_call.1
$region0: #{tpu_custom_call.1}
  #allocation0 [shape = 'u32[]', space=smem, size = 0x4, offset = 0x4, fixed_abs, tag = 'smem constant byte address 0x4 - core index']
  #allocation1 [shape = 'u32[144,128]{1,0:T(1,128)}', space=vmem, size = 0x12000, scoped, tag = 'internal scratch']
  #allocation2 [shape = 'bf16[128,128]{1,0:T(8,128)(2,1)}', space=vmem, size = 0x8000, scoped, tag = 'scratch operand']
  %s0 = inlined_call_operand.vmem [shape: f32[2,128,1], index: 0, kind: input, shape index: {}]
  %s1 = inlined_call_operand.vmem [shape: f32[128,128], index: 1, kind: input, shape index: {}]
  %s2 = inlined_call_operand.hbm [shape: bf16[2,1024,128], index: 2, kind: input, shape index: {}]
  %s3 = inlined_call_operand.hbm [shape: f32[2,1024,128], index: 3, kind: output, shape index: {}]
  %s4 = sld [smem:[#allocation0]]
  $region53: #{tpu_custom_call.1} parent=0
    _
  %s6 = ssub.s32 1, %s4
  %s7 = scalar_select 0, %s6, %s4
  $region1: #{tpu_custom_call.1} parent=0
    #allocation3 [shape = 'u8[262144]{0}', space=vmem, size = 0x40000, scoped, tag = 'input window, operand 2']
    #allocation4 [shape = 's32[2]{0}', space=sflag, size = 0x8, scoped, tag = 'scoped memory for tpu_custom_call.1']
    #allocation5 [shape = 's32[2]{0}', space=sflag, size = 0x8, scoped, tag = 'scoped memory for tpu_custom_call.1']
    #allocation6 [shape = 'u8[524288]{0}', space=vmem, size = 0x80000, scoped, tag = 'output window, operand 0']
    %8 = vsyncpa [#allocation4], 0
    %s9 = scalar_lea.sflag [#allocation4], 1
    %10 = vsyncpa %s9, 0
    %11 = vsyncpa [#allocation5], 0
    %s12 = scalar_lea.sflag [#allocation5], 1
    %13 = vsyncpa %s12, 0
    loop: start=0, step=1, limit=6
    $region2: #{tpu_custom_call.1} parent=1 // loop_pre_header
      _
    $region3: #{tpu_custom_call.1} parent=1 // loop_header
      %s15 = sphi 0, %s19
      %p16 = scmp.ge.s32.totalorder %s15, 6
      %s22 = sphi 0, %s34
      %s23 = sphi 0, %s30
      %s24 = sphi 0, %s22
      %s25 = sphi 0, %s23
      %s26 = sphi 0, %s24
      %s27 = sphi 0, %s25
      %s37 = sphi 0, %s39
      %s40 = sphi 0, %s37
      %s41 = sphi 0, %s40
      %s57 = sphi 0, %s41
      %s61 = sphi 0, %s61
      %s63 = sphi 0, %s61
      %s64 = sphi 0, %s63
      %s78 = sphi 0, %s64
      %s86 = sphi 0, %s88
      %s89 = sphi 0, %s86
      %s90 = sphi 0, %s89
      %s106 = sphi 0, %s90
      %s114 = sphi 0, %s116
      %s117 = sphi 0, %s114
      %s118 = sphi 0, %s117
      %s134 = sphi 0, %s118
    $region4: #{tpu_custom_call.1} parent=1 // loop_header_branch
      %18 = sbr.rel (%p16) target = $region8
    $region5: #{tpu_custom_call.1} parent=1 // loop_body
      %s20 = ssub.s32 %s15, 1
      %s21 = ssub.s32 %s15, 2
      %s28 = sadd.s32 1, %s23
      %p29 = scmp.ge.s32.totalorder %s28, 2
      %s30 = scalar_select %p29, 0, %s28
      %s31 = sadd.s32 1, %s22
      %s32 = scalar_select %p29, %s31, %s22
      %p33 = scmp.ge.s32.totalorder %s32, 2
      %s34 = scalar_select %p33, 0, %s32
      %s35 = ssub.s32 %s22, %s34
      %p36 = scmp.eq.s32.totalorder %s35, 0
      %s38 = sadd.s32 %s37, 1
      %s39 = scalar_select %p36, %s37, %s38
      %p42 = pneg %p36
      %p43 = scmp.eq.s32.totalorder %s15, 3
      %p44 = por %p42, %p43
      %p45 = scmp.ne.s32.totalorder %s37, %s40
      %p46 = scmp.eq.s32.totalorder %s15, 0
      %p47 = por %p45, %p46
      %p48 = scmp.ne.s32.totalorder %s37, %s40
      %p49 = scmp.eq.s32.totalorder %s20, 3
      %p50 = por %p48, %p49
      %p51 = scmp.ne.s32.totalorder %s40, %s41
      %p52 = scmp.eq.s32.totalorder %s20, 0
      %p53 = por %p51, %p52
      %p54 = scmp.ne.s32.totalorder %s40, %s41
      %p55 = scmp.eq.s32.totalorder %s21, 3
      %p56 = por %p54, %p55
      %p58 = scmp.ne.s32.totalorder %s41, %s57
      %p59 = scmp.eq.s32.totalorder %s21, 0
      %p60 = por %p58, %p59
      %s62 = sadd.s32 %s61, 1
      %p65 = scmp.eq.s32.totalorder %s15, 3
      %p66 = scmp.ne.s32.totalorder %s61, %s63
      %p67 = scmp.eq.s32.totalorder %s15, 0
      %p68 = por %p66, %p67
      %p69 = scmp.ne.s32.totalorder %s61, %s63
      %p70 = scmp.eq.s32.totalorder %s20, 3
      %p71 = por %p69, %p70
      %p72 = scmp.ne.s32.totalorder %s63, %s64
      %p73 = scmp.eq.s32.totalorder %s20, 0
      %p74 = por %p72, %p73
      %p75 = scmp.ne.s32.totalorder %s63, %s64
      %p76 = scmp.eq.s32.totalorder %s21, 3
      %p77 = por %p75, %p76
      %p79 = scmp.ne.s32.totalorder %s64, %s78
      %p80 = scmp.eq.s32.totalorder %s21, 0
      %p81 = por %p79, %p80
      %s82 = ssub.s32 %s22, %s34
      %s83 = ssub.s32 %s23, %s30
      %s84 = sor.u32 %s82, %s83
      %p85 = scmp.eq.s32.totalorder %s84, 0
      %s87 = sadd.s32 %s86, 1
      %s88 = scalar_select %p85, %s86, %s87
      %p91 = pneg %p85
      %p92 = scmp.eq.s32.totalorder %s15, 3
      %p93 = por %p91, %p92
      %p94 = scmp.ne.s32.totalorder %s86, %s89
      %p95 = scmp.eq.s32.totalorder %s15, 0
      %p96 = por %p94, %p95
      %p97 = scmp.ne.s32.totalorder %s86, %s89
      %p98 = scmp.eq.s32.totalorder %s20, 3
      %p99 = por %p97, %p98
      %p100 = scmp.ne.s32.totalorder %s89, %s90
      %p101 = scmp.eq.s32.totalorder %s20, 0
      %p102 = por %p100, %p101
      %p103 = scmp.ne.s32.totalorder %s89, %s90
      %p104 = scmp.eq.s32.totalorder %s21, 3
      %p105 = por %p103, %p104
      %p107 = scmp.ne.s32.totalorder %s90, %s106
      %p108 = scmp.eq.s32.totalorder %s21, 0
      %p109 = por %p107, %p108
      %s110 = ssub.s32 %s22, %s34
      %s111 = ssub.s32 %s23, %s30
      %s112 = sor.u32 %s110, %s111
      %p113 = scmp.eq.s32.totalorder %s112, 0
      %s115 = sadd.s32 %s114, 1
      %s116 = scalar_select %p113, %s114, %s115
      %p119 = pneg %p113
      %p120 = scmp.eq.s32.totalorder %s15, 3
      %p121 = por %p119, %p120
      %p122 = scmp.ne.s32.totalorder %s114, %s117
      %p123 = scmp.eq.s32.totalorder %s15, 0
      %p124 = por %p122, %p123
      %p125 = scmp.ne.s32.totalorder %s114, %s117
      %p126 = scmp.eq.s32.totalorder %s20, 3
      %p127 = por %p125, %p126
      %p128 = scmp.ne.s32.totalorder %s117, %s118
      %p129 = scmp.eq.s32.totalorder %s20, 0
      %p130 = por %p128, %p129
      %p131 = scmp.ne.s32.totalorder %s117, %s118
      %p132 = scmp.eq.s32.totalorder %s21, 3
      %p133 = por %p131, %p132
      %p135 = scmp.ne.s32.totalorder %s118, %s134
      %p136 = scmp.eq.s32.totalorder %s21, 0
      %p137 = por %p135, %p136
      %p138 = scmp.le.s32.totalorder 1, %s15
      %p139 = scmp.lt.s32.totalorder %s15, 5
      %p140 = pnand %p138, %p139
      %p141 = pneg %p140
      // Predicated region
      $region9: #{tpu_custom_call.1} parent=5 // pred_check
        _
      $region10: #{tpu_custom_call.1} parent=5 // pred_check_branch
        %143 = sbr.rel (%p140) target = $region12
      $region11: #{tpu_custom_call.1} parent=5 // pred_region
        %s144 = ssub.s32 %s15, 1
        // Predicated region
        $region13: #{tpu_custom_call.1} parent=11 // pred_check
          %p145 = pneg %p74
        $region14: #{tpu_custom_call.1} parent=11 // pred_check_branch
          %147 = sbr.rel (%p145) target = $region16
        $region15: #{tpu_custom_call.1} parent=11 // pred_region
          _
        $region16: #{tpu_custom_call.1} parent=11 // pred_fallthru
          _
      $region12: #{tpu_custom_call.1} parent=5 // pred_fallthru
        _
      %p148 = scmp.lt.s32.totalorder %s15, 4
      // Predicated region
      $region17: #{tpu_custom_call.1} parent=5 // pred_check
        %p149 = pneg %p148
      $region18: #{tpu_custom_call.1} parent=5 // pred_check_branch
        %151 = sbr.rel (%p149) target = $region20
      $region19: #{tpu_custom_call.1} parent=5 // pred_region
        // Predicated region
        $region21: #{tpu_custom_call.1} parent=19 // pred_check
          %p152 = pneg %p47
        $region22: #{tpu_custom_call.1} parent=19 // pred_check_branch
          %154 = sbr.rel (%p152) target = $region24
        $region23: #{tpu_custom_call.1} parent=19 // pred_region
          %p155 = scmp.lt.s32.totalorder %s22, 1
          %s156 = scalar_select %p155, %s22, 1
          %s157 = smul.addr %s156, 16
          %s158 = smul.addr %s157, 8
          %s159 = scalar_lea.vmem %s0, %s158
        $region24: #{tpu_custom_call.1} parent=19 // pred_fallthru
          _
        // Predicated region
        $region25: #{tpu_custom_call.1} parent=19 // pred_check
          %p160 = pneg %p96
        $region26: #{tpu_custom_call.1} parent=19 // pred_check_branch
          %162 = sbr.rel (%p160) target = $region28
        $region27: #{tpu_custom_call.1} parent=19 // pred_region
          %s163 = sand.u32 %s86, 1
          %s164 = scalar_lea.sflag [#allocation4], %s163
          %s165 = sand.u32 %s86, 1
          %s166 = smul.addr %s165, 256
          %s167 = scalar_lea.vmem [#allocation3], %s166
          %s168 = smul.u32 64, %s23
          %s170 = ssub.s32 4096, 4096
          %171 = vsyncadd %s164, %s170
          %s172 = smul.addr %s22, 128
          %s173 = sadd.s32 %s168, %s172
          %s174 = smul.addr %s173, 64
          %s175 = scalar_lea.hbm %s2, %s174
          %s176 = sshll.u32 %s167, 4
          %s177 = int_to_ptr.vmem [resolvable:$true] %s176
          %182 = dma.hbm_to_vmem [thread:$0]  %s175, 4096, %s177, %s164, 64, 64, 4
        $region28: #{tpu_custom_call.1} parent=19 // pred_fallthru
          _
      $region20: #{tpu_custom_call.1} parent=5 // pred_fallthru
        _
      %p183 = scmp.le.s32.totalorder 1, %s15
      %p184 = scmp.lt.s32.totalorder %s15, 5
      %p185 = pnand %p183, %p184
      %p186 = pneg %p185
      // Predicated region
      $region29: #{tpu_custom_call.1} parent=5 // pred_check
        _
      $region30: #{tpu_custom_call.1} parent=5 // pred_check_branch
        %188 = sbr.rel (%p185) target = $region32
      $region31: #{tpu_custom_call.1} parent=5 // pred_region
        %s189 = ssub.s32 %s15, 1
        %s190 = sand.u32 %s89, 1
        %s191 = scalar_lea.sflag [#allocation4], %s190
        %s192 = sand.u32 %s89, 1
        %s193 = smul.addr %s192, 256
        %s194 = scalar_lea.vmem [#allocation3], %s193
        // Predicated region
        $region33: #{tpu_custom_call.1} parent=31 // pred_check
          %p195 = pneg %p102
        $region34: #{tpu_custom_call.1} parent=31 // pred_check_branch
          %197 = sbr.rel (%p195) target = $region36
        $region35: #{tpu_custom_call.1} parent=31 // pred_region
          %198 = dma.done %s191, 4096
        $region36: #{tpu_custom_call.1} parent=31 // pred_fallthru
          _
        %p199 = scmp.lt.s32.totalorder %s24, 1
        %s200 = scalar_select %p199, %s24, 1
        %s201 = smul.addr %s200, 16
        %s202 = smul.addr %s201, 8
        %s203 = scalar_lea.vmem %s0, %s202
        %p204 = pneg %p53
        %p205 = pneg %p50
        %p206 = pneg %p74
        %p207 = pneg %p71
        %s208 = sand.u32 %s89, 1
        %s209 = scalar_lea.sflag [#allocation4], %s208
        %s210 = sand.u32 %s89, 1
        %s211 = smul.addr %s210, 256
        %s212 = scalar_lea.vmem [#allocation3], %s211
        %p213 = pneg %p102
        %p214 = pneg %p99
        %p215 = pneg %p130
        %p216 = pneg %p127
        %s217 = sand.u32 %s117, 1
        %s218 = scalar_lea.sflag [#allocation5], %s217
        %s219 = sand.u32 %s117, 1
        %s220 = smul.addr %s219, 512
        %s221 = scalar_lea.vmem [#allocation6], %s220
        %p222 = scmp.lt.s32.totalorder %s24, 1
        %s223 = scalar_select %p222, %s24, 1
        %s224 = smul.addr %s223, 16
        %s225 = smul.addr %s224, 8
        %s226 = scalar_lea.vmem %s0, %s225
        %s227 = smul.u32 64, %s25
        %s228 = smul.u32 64, %s25
        %p230 = scmp.eq.s32.totalorder %s25, 0
        // Predicated region
        $region37: #{tpu_custom_call.1} parent=31 // pred_check
          %p231 = pneg %p230
        $region38: #{tpu_custom_call.1} parent=31 // pred_check_branch
          %233 = sbr.rel (%p231) target = $region40
        $region39: #{tpu_custom_call.1} parent=31 // pred_region
          %v234 = vld [vmem:[%s1] sm:$0xff]
          %v235 = vld [vmem:[%s1 + $0x8] sm:$0xff]
          %v236 = vld [vmem:[%s1 + $0x10] sm:$0xff]
          %v237 = vld [vmem:[%s1 + $0x18] sm:$0xff]
          %v238 = vld [vmem:[%s1 + $0x20] sm:$0xff]
          %v239 = vld [vmem:[%s1 + $0x28] sm:$0xff]
          %v240 = vld [vmem:[%s1 + $0x30] sm:$0xff]
          %v241 = vld [vmem:[%s1 + $0x38] sm:$0xff]
          %v242 = vld [vmem:[%s1 + $0x40] sm:$0xff]
          %v243 = vld [vmem:[%s1 + $0x48] sm:$0xff]
          %v244 = vld [vmem:[%s1 + $0x50] sm:$0xff]
          %v245 = vld [vmem:[%s1 + $0x58] sm:$0xff]
          %v246 = vld [vmem:[%s1 + $0x60] sm:$0xff]
          %v247 = vld [vmem:[%s1 + $0x68] sm:$0xff]
          %v248 = vld [vmem:[%s1 + $0x70] sm:$0xff]
          %v249 = vld [vmem:[%s1 + $0x78] sm:$0xff]
          %v250 = vld [vmem:[%s226] sm:$0xff]
          %v251 = vld [vmem:[%s226 + $0x8] sm:$0xff]
          %v252 = vld [vmem:[%s226 + $0x10] sm:$0xff]
          %v253 = vld [vmem:[%s226 + $0x18] sm:$0xff]
          %v254 = vld [vmem:[%s226 + $0x20] sm:$0xff]
          %v255 = vld [vmem:[%s226 + $0x28] sm:$0xff]
          %v256 = vld [vmem:[%s226 + $0x30] sm:$0xff]
          %v257 = vld [vmem:[%s226 + $0x38] sm:$0xff]
          %v258 = vld [vmem:[%s226 + $0x40] sm:$0xff]
          %v259 = vld [vmem:[%s226 + $0x48] sm:$0xff]
          %v260 = vld [vmem:[%s226 + $0x50] sm:$0xff]
          %v261 = vld [vmem:[%s226 + $0x58] sm:$0xff]
          %v262 = vld [vmem:[%s226 + $0x60] sm:$0xff]
          %v263 = vld [vmem:[%s226 + $0x68] sm:$0xff]
          %v264 = vld [vmem:[%s226 + $0x70] sm:$0xff]
          %v265 = vld [vmem:[%s226 + $0x78] sm:$0xff]
          %267 = vset.pattern.permute.xlu0 0
          %268 = vperm.xlu0 %267, %v250
          %v269 = vpop.permute.xlu0 %268
          %272 = vset.pattern.permute.xlu0 0
          %273 = vperm.xlu0 %272, %v251
          %v274 = vpop.permute.xlu0 %273
          %277 = vset.pattern.permute.xlu0 0
          %278 = vperm.xlu0 %277, %v252
          %v279 = vpop.permute.xlu0 %278
          %282 = vset.pattern.permute.xlu0 0
          %283 = vperm.xlu0 %282, %v253
          %v284 = vpop.permute.xlu0 %283
          %287 = vset.pattern.permute.xlu0 0
          %288 = vperm.xlu0 %287, %v254
          %v289 = vpop.permute.xlu0 %288
          %292 = vset.pattern.permute.xlu0 0
          %293 = vperm.xlu0 %292, %v255
          %v294 = vpop.permute.xlu0 %293
          %297 = vset.pattern.permute.xlu0 0
          %298 = vperm.xlu0 %297, %v256
          %v299 = vpop.permute.xlu0 %298
          %302 = vset.pattern.permute.xlu0 0
          %303 = vperm.xlu0 %302, %v257
          %v304 = vpop.permute.xlu0 %303
          %307 = vset.pattern.permute.xlu0 0
          %308 = vperm.xlu0 %307, %v258
          %v309 = vpop.permute.xlu0 %308
          %312 = vset.pattern.permute.xlu0 0
          %313 = vperm.xlu0 %312, %v259
          %v314 = vpop.permute.xlu0 %313
          %317 = vset.pattern.permute.xlu0 0
          %318 = vperm.xlu0 %317, %v260
          %v319 = vpop.permute.xlu0 %318
          %322 = vset.pattern.permute.xlu0 0
          %323 = vperm.xlu0 %322, %v261
          %v324 = vpop.permute.xlu0 %323
          %327 = vset.pattern.permute.xlu0 0
          %328 = vperm.xlu0 %327, %v262
          %v329 = vpop.permute.xlu0 %328
          %332 = vset.pattern.permute.xlu0 0
          %333 = vperm.xlu0 %332, %v263
          %v334 = vpop.permute.xlu0 %333
          %337 = vset.pattern.permute.xlu0 0
          %338 = vperm.xlu0 %337, %v264
          %v339 = vpop.permute.xlu0 %338
          %342 = vset.pattern.permute.xlu0 0
          %343 = vperm.xlu0 %342, %v265
          %v344 = vpop.permute.xlu0 %343
          %v346 = vmul.f32 %v234, %v269
          %v347 = vmul.f32 %v235, %v274
          %v348 = vmul.f32 %v236, %v279
          %v349 = vmul.f32 %v237, %v284
          %v350 = vmul.f32 %v238, %v289
          %v351 = vmul.f32 %v239, %v294
          %v352 = vmul.f32 %v240, %v299
          %v353 = vmul.f32 %v241, %v304
          %v354 = vmul.f32 %v242, %v309
          %v355 = vmul.f32 %v243, %v314
          %v356 = vmul.f32 %v244, %v319
          %v357 = vmul.f32 %v245, %v324
          %v358 = vmul.f32 %v246, %v329
          %v359 = vmul.f32 %v247, %v334
          %v360 = vmul.f32 %v248, %v339
          %v361 = vmul.f32 %v249, %v344
          %v362 = vmul.f32 %v346, %v346
          %v363 = vmul.f32 %v347, %v347
          %v364 = vmul.f32 %v348, %v348
          %v365 = vmul.f32 %v349, %v349
          %v366 = vmul.f32 %v350, %v350
          %v367 = vmul.f32 %v351, %v351
          %v368 = vmul.f32 %v352, %v352
          %v369 = vmul.f32 %v353, %v353
          %v370 = vmul.f32 %v354, %v354
          %v371 = vmul.f32 %v355, %v355
          %v372 = vmul.f32 %v356, %v356
          %v373 = vmul.f32 %v357, %v357
          %v374 = vmul.f32 %v358, %v358
          %v375 = vmul.f32 %v359, %v359
          %v376 = vmul.f32 %v360, %v360
          %v377 = vmul.f32 %v361, %v361
          %v378 = vadd.f32 %v362, %v363
          %v379 = vadd.f32 %v378, %v364
          %v380 = vadd.f32 %v379, %v365
          %v381 = vadd.f32 %v380, %v366
          %v382 = vadd.f32 %v381, %v367
          %v383 = vadd.f32 %v382, %v368
          %v384 = vadd.f32 %v383, %v369
          %v385 = vadd.f32 %v384, %v370
          %v386 = vadd.f32 %v385, %v371
          %v387 = vadd.f32 %v386, %v372
          %v388 = vadd.f32 %v387, %v373
          %v389 = vadd.f32 %v388, %v374
          %v390 = vadd.f32 %v389, %v375
          %v391 = vadd.f32 %v390, %v376
          %v392 = vadd.f32 %v391, %v377
          %v393 = vrot.slane %v392, 4
          %v394 = vadd.f32 %v392, %v393
          %v395 = vrot.slane %v394, 2
          %v396 = vadd.f32 %v394, %v395
          %v397 = vrot.slane %v396, 1
          %v398 = vadd.f32 %v396, %v397
          %v399 = vadd.f32 %v398, 1e-08
          %v400 = vrsqrt.pop %v399
          %v401 = vmul.f32 %v346, %v400
          %v402 = vmul.f32 %v347, %v400
          %v403 = vmul.f32 %v348, %v400
          %v404 = vmul.f32 %v349, %v400
          %v405 = vmul.f32 %v350, %v400
          %v406 = vmul.f32 %v351, %v400
          %v407 = vmul.f32 %v352, %v400
          %v408 = vmul.f32 %v353, %v400
          %v409 = vmul.f32 %v354, %v400
          %v410 = vmul.f32 %v355, %v400
          %v411 = vmul.f32 %v356, %v400
          %v412 = vmul.f32 %v357, %v400
          %v413 = vmul.f32 %v358, %v400
          %v414 = vmul.f32 %v359, %v400
          %v415 = vmul.f32 %v360, %v400
          %v416 = vmul.f32 %v361, %v400
          %v417 = vpack.c.bf16 %v402, %v401
          %v418 = vpack.c.bf16 %v404, %v403
          %v419 = vpack.c.bf16 %v406, %v405
          %v420 = vpack.c.bf16 %v408, %v407
          %v421 = vpack.c.bf16 %v410, %v409
          %v422 = vpack.c.bf16 %v412, %v411
          %v423 = vpack.c.bf16 %v414, %v413
          %v424 = vpack.c.bf16 %v416, %v415
          %v433 = vunpack.c.l.b16 %v417
          %v434 = vunpack.c.h.b16 %v417
          %v435 = vunpack.c.l.b16 %v418
          %v436 = vunpack.c.h.b16 %v418
          %v437 = vunpack.c.l.b16 %v419
          %v438 = vunpack.c.h.b16 %v419
          %v439 = vunpack.c.l.b16 %v420
          %v440 = vunpack.c.h.b16 %v420
          %v441 = vunpack.c.l.b16 %v421
          %v442 = vunpack.c.h.b16 %v421
          %v443 = vunpack.c.l.b16 %v422
          %v444 = vunpack.c.h.b16 %v422
          %v445 = vunpack.c.l.b16 %v423
          %v446 = vunpack.c.h.b16 %v423
          %v447 = vunpack.c.l.b16 %v424
          %v448 = vunpack.c.h.b16 %v424
          %v449 = vpack.c.b16 %v433, %v433
          %v450 = vpack.c.b16 %v434, %v434
          %v451 = vpack.c.b16 %v435, %v435
          %v452 = vpack.c.b16 %v436, %v436
          %v453 = vpack.c.b16 %v437, %v437
          %v454 = vpack.c.b16 %v438, %v438
          %v455 = vpack.c.b16 %v439, %v439
          %v456 = vpack.c.b16 %v440, %v440
          %v457 = vpack.c.b16 %v441, %v441
          %v458 = vpack.c.b16 %v442, %v442
          %v459 = vpack.c.b16 %v443, %v443
          %v460 = vpack.c.b16 %v444, %v444
          %v461 = vpack.c.b16 %v445, %v445
          %v462 = vpack.c.b16 %v446, %v446
          %v463 = vpack.c.b16 %v447, %v447
          %v464 = vpack.c.b16 %v448, %v448
          %481 = vst [vmem:[#allocation2] sm:$0xf] %v449
          %482 = vst [vmem:[#allocation2 + $0x4] sm:$0xf] %v450
          %483 = vst [vmem:[#allocation2 + $0x8] sm:$0xf] %v451
          %484 = vst [vmem:[#allocation2 + $0xc] sm:$0xf] %v452
          %485 = vst [vmem:[#allocation2 + $0x10] sm:$0xf] %v453
          %486 = vst [vmem:[#allocation2 + $0x14] sm:$0xf] %v454
          %487 = vst [vmem:[#allocation2 + $0x18] sm:$0xf] %v455
          %488 = vst [vmem:[#allocation2 + $0x1c] sm:$0xf] %v456
          %489 = vst [vmem:[#allocation2 + $0x20] sm:$0xf] %v457
          %490 = vst [vmem:[#allocation2 + $0x24] sm:$0xf] %v458
          %491 = vst [vmem:[#allocation2 + $0x28] sm:$0xf] %v459
          %492 = vst [vmem:[#allocation2 + $0x2c] sm:$0xf] %v460
          %493 = vst [vmem:[#allocation2 + $0x30] sm:$0xf] %v461
          %494 = vst [vmem:[#allocation2 + $0x34] sm:$0xf] %v462
          %495 = vst [vmem:[#allocation2 + $0x38] sm:$0xf] %v463
          %496 = vst [vmem:[#allocation2 + $0x3c] sm:$0xf] %v464
        $region40: #{tpu_custom_call.1} parent=31 // pred_fallthru
          _
        %v497 = vld [vmem:[%s194] sm:$0xf]
        %v498 = vld [vmem:[%s194 + $0x4] sm:$0xf]
        %v499 = vld [vmem:[%s194 + $0x8] sm:$0xf]
        %v500 = vld [vmem:[%s194 + $0xc] sm:$0xf]
        %v501 = vld [vmem:[%s194 + $0x10] sm:$0xf]
        %v502 = vld [vmem:[%s194 + $0x14] sm:$0xf]
        %v503 = vld [vmem:[%s194 + $0x18] sm:$0xf]
        %v504 = vld [vmem:[%s194 + $0x1c] sm:$0xf]
        %v505 = vld [vmem:[%s194 + $0x20] sm:$0xf]
        %v506 = vld [vmem:[%s194 + $0x24] sm:$0xf]
        %v507 = vld [vmem:[%s194 + $0x28] sm:$0xf]
        %v508 = vld [vmem:[%s194 + $0x2c] sm:$0xf]
        %v509 = vld [vmem:[%s194 + $0x30] sm:$0xf]
        %v510 = vld [vmem:[%s194 + $0x34] sm:$0xf]
        %v511 = vld [vmem:[%s194 + $0x38] sm:$0xf]
        %v512 = vld [vmem:[%s194 + $0x3c] sm:$0xf]
        %v513 = vld [vmem:[%s194 + $0x40] sm:$0xf]
        %v514 = vld [vmem:[%s194 + $0x44] sm:$0xf]
        %v515 = vld [vmem:[%s194 + $0x48] sm:$0xf]
        %v516 = vld [vmem:[%s194 + $0x4c] sm:$0xf]
        %v517 = vld [vmem:[%s194 + $0x50] sm:$0xf]
        %v518 = vld [vmem:[%s194 + $0x54] sm:$0xf]
        %v519 = vld [vmem:[%s194 + $0x58] sm:$0xf]
        %v520 = vld [vmem:[%s194 + $0x5c] sm:$0xf]
        %v521 = vld [vmem:[%s194 + $0x60] sm:$0xf]
        %v522 = vld [vmem:[%s194 + $0x64] sm:$0xf]
        %v523 = vld [vmem:[%s194 + $0x68] sm:$0xf]
        %v524 = vld [vmem:[%s194 + $0x6c] sm:$0xf]
        %v525 = vld [vmem:[%s194 + $0x70] sm:$0xf]
        %v526 = vld [vmem:[%s194 + $0x74] sm:$0xf]
        %v527 = vld [vmem:[%s194 + $0x78] sm:$0xf]
        %v528 = vld [vmem:[%s194 + $0x7c] sm:$0xf]
        %v529 = vld [vmem:[%s194 + $0x80] sm:$0xf]
        %v530 = vld [vmem:[%s194 + $0x84] sm:$0xf]
        %v531 = vld [vmem:[%s194 + $0x88] sm:$0xf]
        %v532 = vld [vmem:[%s194 + $0x8c] sm:$0xf]
        %v533 = vld [vmem:[%s194 + $0x90] sm:$0xf]
        %v534 = vld [vmem:[%s194 + $0x94] sm:$0xf]
        %v535 = vld [vmem:[%s194 + $0x98] sm:$0xf]
        %v536 = vld [vmem:[%s194 + $0x9c] sm:$0xf]
        %v537 = vld [vmem:[%s194 + $0xa0] sm:$0xf]
        %v538 = vld [vmem:[%s194 + $0xa4] sm:$0xf]
        %v539 = vld [vmem:[%s194 + $0xa8] sm:$0xf]
        %v540 = vld [vmem:[%s194 + $0xac] sm:$0xf]
        %v541 = vld [vmem:[%s194 + $0xb0] sm:$0xf]
        %v542 = vld [vmem:[%s194 + $0xb4] sm:$0xf]
        %v543 = vld [vmem:[%s194 + $0xb8] sm:$0xf]
        %v544 = vld [vmem:[%s194 + $0xbc] sm:$0xf]
        %v545 = vld [vmem:[%s194 + $0xc0] sm:$0xf]
        %v546 = vld [vmem:[%s194 + $0xc4] sm:$0xf]
        %v547 = vld [vmem:[%s194 + $0xc8] sm:$0xf]
        %v548 = vld [vmem:[%s194 + $0xcc] sm:$0xf]
        %v549 = vld [vmem:[%s194 + $0xd0] sm:$0xf]
        %v550 = vld [vmem:[%s194 + $0xd4] sm:$0xf]
        %v551 = vld [vmem:[%s194 + $0xd8] sm:$0xf]
        %v552 = vld [vmem:[%s194 + $0xdc] sm:$0xf]
        %v553 = vld [vmem:[%s194 + $0xe0] sm:$0xf]
        %v554 = vld [vmem:[%s194 + $0xe4] sm:$0xf]
        %v555 = vld [vmem:[%s194 + $0xe8] sm:$0xf]
        %v556 = vld [vmem:[%s194 + $0xec] sm:$0xf]
        %v557 = vld [vmem:[%s194 + $0xf0] sm:$0xf]
        %v558 = vld [vmem:[%s194 + $0xf4] sm:$0xf]
        %v559 = vld [vmem:[%s194 + $0xf8] sm:$0xf]
        %v560 = vld [vmem:[%s194 + $0xfc] sm:$0xf]
        %v561 = vld [vmem:[#allocation2] sm:$0xf]
        %v562 = vld [vmem:[#allocation2 + $0x4] sm:$0xf]
        %v563 = vld [vmem:[#allocation2 + $0x8] sm:$0xf]
        %v564 = vld [vmem:[#allocation2 + $0xc] sm:$0xf]
        %v565 = vld [vmem:[#allocation2 + $0x10] sm:$0xf]
        %v566 = vld [vmem:[#allocation2 + $0x14] sm:$0xf]
        %v567 = vld [vmem:[#allocation2 + $0x18] sm:$0xf]
        %v568 = vld [vmem:[#allocation2 + $0x1c] sm:$0xf]
        %v569 = vld [vmem:[#allocation2 + $0x20] sm:$0xf]
        %v570 = vld [vmem:[#allocation2 + $0x24] sm:$0xf]
        %v571 = vld [vmem:[#allocation2 + $0x28] sm:$0xf]
        %v572 = vld [vmem:[#allocation2 + $0x2c] sm:$0xf]
        %v573 = vld [vmem:[#allocation2 + $0x30] sm:$0xf]
        %v574 = vld [vmem:[#allocation2 + $0x34] sm:$0xf]
        %v575 = vld [vmem:[#allocation2 + $0x38] sm:$0xf]
        %v576 = vld [vmem:[#allocation2 + $0x3c] sm:$0xf]
        %v641 = vunpack.c.l.b16 %v497
        %v642 = vunpack.c.l.b16 %v498
        %v643 = vunpack.c.l.b16 %v499
        %v644 = vunpack.c.l.b16 %v500
        %v645 = vunpack.c.l.b16 %v501
        %v646 = vunpack.c.l.b16 %v502
        %v647 = vunpack.c.l.b16 %v503
        %v648 = vunpack.c.l.b16 %v504
        %v649 = vunpack.c.l.b16 %v505
        %v650 = vunpack.c.l.b16 %v506
        %v651 = vunpack.c.l.b16 %v507
        %v652 = vunpack.c.l.b16 %v508
        %v653 = vunpack.c.l.b16 %v509
        %v654 = vunpack.c.l.b16 %v510
        %v655 = vunpack.c.l.b16 %v511
        %v656 = vunpack.c.l.b16 %v512
        %v657 = vunpack.c.l.b16 %v513
        %v658 = vunpack.c.l.b16 %v514
        %v659 = vunpack.c.l.b16 %v515
        %v660 = vunpack.c.l.b16 %v516
        %v661 = vunpack.c.l.b16 %v517
        %v662 = vunpack.c.l.b16 %v518
        %v663 = vunpack.c.l.b16 %v519
        %v664 = vunpack.c.l.b16 %v520
        %v665 = vunpack.c.l.b16 %v521
        %v666 = vunpack.c.l.b16 %v522
        %v667 = vunpack.c.l.b16 %v523
        %v668 = vunpack.c.l.b16 %v524
        %v669 = vunpack.c.l.b16 %v525
        %v670 = vunpack.c.l.b16 %v526
        %v671 = vunpack.c.l.b16 %v527
        %v672 = vunpack.c.l.b16 %v528
        %v673 = vunpack.c.l.b16 %v529
        %v674 = vunpack.c.l.b16 %v530
        %v675 = vunpack.c.l.b16 %v531
        %v676 = vunpack.c.l.b16 %v532
        %v677 = vunpack.c.l.b16 %v533
        %v678 = vunpack.c.l.b16 %v534
        %v679 = vunpack.c.l.b16 %v535
        %v680 = vunpack.c.l.b16 %v536
        %v681 = vunpack.c.l.b16 %v537
        %v682 = vunpack.c.l.b16 %v538
        %v683 = vunpack.c.l.b16 %v539
        %v684 = vunpack.c.l.b16 %v540
        %v685 = vunpack.c.l.b16 %v541
        %v686 = vunpack.c.l.b16 %v542
        %v687 = vunpack.c.l.b16 %v543
        %v688 = vunpack.c.l.b16 %v544
        %v689 = vunpack.c.l.b16 %v545
        %v690 = vunpack.c.l.b16 %v546
        %v691 = vunpack.c.l.b16 %v547
        %v692 = vunpack.c.l.b16 %v548
        %v693 = vunpack.c.l.b16 %v549
        %v694 = vunpack.c.l.b16 %v550
        %v695 = vunpack.c.l.b16 %v551
        %v696 = vunpack.c.l.b16 %v552
        %v697 = vunpack.c.l.b16 %v553
        %v698 = vunpack.c.l.b16 %v554
        %v699 = vunpack.c.l.b16 %v555
        %v700 = vunpack.c.l.b16 %v556
        %v701 = vunpack.c.l.b16 %v557
        %v702 = vunpack.c.l.b16 %v558
        %v703 = vunpack.c.l.b16 %v559
        %v704 = vunpack.c.l.b16 %v560
        %v705 = vpack.c.b16 %v642, %v641
        %v706 = vpack.c.b16 %v644, %v643
        %v707 = vpack.c.b16 %v646, %v645
        %v708 = vpack.c.b16 %v648, %v647
        %v709 = vpack.c.b16 %v650, %v649
        %v710 = vpack.c.b16 %v652, %v651
        %v711 = vpack.c.b16 %v654, %v653
        %v712 = vpack.c.b16 %v656, %v655
        %v713 = vpack.c.b16 %v658, %v657
        %v714 = vpack.c.b16 %v660, %v659
        %v715 = vpack.c.b16 %v662, %v661
        %v716 = vpack.c.b16 %v664, %v663
        %v717 = vpack.c.b16 %v666, %v665
        %v718 = vpack.c.b16 %v668, %v667
        %v719 = vpack.c.b16 %v670, %v669
        %v720 = vpack.c.b16 %v672, %v671
        %v721 = vpack.c.b16 %v674, %v673
        %v722 = vpack.c.b16 %v676, %v675
        %v723 = vpack.c.b16 %v678, %v677
        %v724 = vpack.c.b16 %v680, %v679
        %v725 = vpack.c.b16 %v682, %v681
        %v726 = vpack.c.b16 %v684, %v683
        %v727 = vpack.c.b16 %v686, %v685
        %v728 = vpack.c.b16 %v688, %v687
        %v729 = vpack.c.b16 %v690, %v689
        %v730 = vpack.c.b16 %v692, %v691
        %v731 = vpack.c.b16 %v694, %v693
        %v732 = vpack.c.b16 %v696, %v695
        %v733 = vpack.c.b16 %v698, %v697
        %v734 = vpack.c.b16 %v700, %v699
        %v735 = vpack.c.b16 %v702, %v701
        %v736 = vpack.c.b16 %v704, %v703
        %v785 = vunpack.c.l.b16 %v561
        %v786 = vunpack.c.l.b16 %v562
        %v787 = vunpack.c.l.b16 %v563
        %v788 = vunpack.c.l.b16 %v564
        %v789 = vunpack.c.l.b16 %v565
        %v790 = vunpack.c.l.b16 %v566
        %v791 = vunpack.c.l.b16 %v567
        %v792 = vunpack.c.l.b16 %v568
        %v793 = vunpack.c.l.b16 %v569
        %v794 = vunpack.c.l.b16 %v570
        %v795 = vunpack.c.l.b16 %v571
        %v796 = vunpack.c.l.b16 %v572
        %v797 = vunpack.c.l.b16 %v573
        %v798 = vunpack.c.l.b16 %v574
        %v799 = vunpack.c.l.b16 %v575
        %v800 = vunpack.c.l.b16 %v576
        %v801 = vpack.c.b16 %v786, %v785
        %v802 = vpack.c.b16 %v788, %v787
        %v803 = vpack.c.b16 %v790, %v789
        %v804 = vpack.c.b16 %v792, %v791
        %v805 = vpack.c.b16 %v794, %v793
        %v806 = vpack.c.b16 %v796, %v795
        %v807 = vpack.c.b16 %v798, %v797
        %v808 = vpack.c.b16 %v800, %v799
        %817 = vmatprep.subr.bf16.mxu0 0
        %818 = vmatpush1.bf16.msra.mxu0 %v808
        %819 = vmatprep.subr.bf16.mxu0 0
        %820 = vmatpush1.bf16.msra.mxu0 %v807
        %821 = vmatprep.subr.bf16.mxu0 0
        %822 = vmatpush1.bf16.msra.mxu0 %v806
        %823 = vmatprep.subr.bf16.mxu0 0
        %824 = vmatpush1.bf16.msra.mxu0 %v805
        %825 = vmatprep.subr.bf16.mxu0 0
        %826 = vmatpush1.bf16.msra.mxu0 %v804
        %827 = vmatprep.subr.bf16.mxu0 0
        %828 = vmatpush1.bf16.msra.mxu0 %v803
        %829 = vmatprep.subr.bf16.mxu0 0
        %830 = vmatpush1.bf16.msra.mxu0 %v802
        %831 = vmatprep.subr.bf16.mxu0 0
        %832 = vmatpush1.bf16.msra.mxu0 %v801
        %833 = vmatprep.subr.bf16.mxu0 0
        %834 = vmatpush2.bf16.msra.mxu0 0
        %835 = vmatprep.subr.bf16.mxu0 0
        %836 = vmatpush2.bf16.msra.mxu0 0
        %837 = vmatprep.subr.bf16.mxu0 0
        %838 = vmatpush2.bf16.msra.mxu0 0
        %839 = vmatprep.subr.bf16.mxu0 0
        %840 = vmatpush2.bf16.msra.mxu0 0
        %841 = vmatprep.subr.bf16.mxu0 0
        %842 = vmatpush2.bf16.msra.mxu0 0
        %843 = vmatprep.subr.bf16.mxu0 0
        %844 = vmatpush2.bf16.msra.mxu0 0
        %845 = vmatprep.subr.bf16.mxu0 0
        %846 = vmatpush2.bf16.msra.mxu0 0
        %847 = vmatprep.subr.bf16.mxu0 0
        %848 = vmatpush2.bf16.msra.mxu0 0
        %849 = vmatprep.mubr.bf16.mxu0 0
        %850 = vmatmul.mubr.bf16.gmra.mxu0 %v705
        %v851 = vpop.f32.mrf.mxu0
        %v852 = vadd.f32 0.0, %v851
        %v853 = vpop.f32.mrf.mxu0
        %v854 = vpop.f32.mrf.mxu0
        %v855 = vadd.f32 0.0, %v854
        %v856 = vpop.f32.mrf.mxu0
        %857 = vmatprep.mubr.bf16.mxu0 0
        %858 = vmatmul.mubr.bf16.gmra.mxu0 %v706
        %v859 = vpop.f32.mrf.mxu0
        %v860 = vadd.f32 0.0, %v859
        %v861 = vpop.f32.mrf.mxu0
        %v862 = vpop.f32.mrf.mxu0
        %v863 = vadd.f32 0.0, %v862
        %v864 = vpop.f32.mrf.mxu0
        %865 = vmatprep.mubr.bf16.mxu0 0
        %866 = vmatmul.mubr.bf16.gmra.mxu0 %v707
        %v867 = vpop.f32.mrf.mxu0
        %v868 = vadd.f32 0.0, %v867
        %v869 = vpop.f32.mrf.mxu0
        %v870 = vpop.f32.mrf.mxu0
        %v871 = vadd.f32 0.0, %v870
        %v872 = vpop.f32.mrf.mxu0
        %873 = vmatprep.mubr.bf16.mxu0 0
        %874 = vmatmul.mubr.bf16.gmra.mxu0 %v708
        %v875 = vpop.f32.mrf.mxu0
        %v876 = vadd.f32 0.0, %v875
        %v877 = vpop.f32.mrf.mxu0
        %v878 = vpop.f32.mrf.mxu0
        %v879 = vadd.f32 0.0, %v878
        %v880 = vpop.f32.mrf.mxu0
        %881 = vmatprep.mubr.bf16.mxu0 0
        %882 = vmatmul.mubr.bf16.gmra.mxu0 %v709
        %v883 = vpop.f32.mrf.mxu0
        %v884 = vadd.f32 0.0, %v883
        %v885 = vpop.f32.mrf.mxu0
        %v886 = vpop.f32.mrf.mxu0
        %v887 = vadd.f32 0.0, %v886
        %v888 = vpop.f32.mrf.mxu0
        %889 = vmatprep.mubr.bf16.mxu0 0
        %890 = vmatmul.mubr.bf16.gmra.mxu0 %v710
        %v891 = vpop.f32.mrf.mxu0
        %v892 = vadd.f32 0.0, %v891
        %v893 = vpop.f32.mrf.mxu0
        %v894 = vpop.f32.mrf.mxu0
        %v895 = vadd.f32 0.0, %v894
        %v896 = vpop.f32.mrf.mxu0
        %897 = vmatprep.mubr.bf16.mxu0 0
        %898 = vmatmul.mubr.bf16.gmra.mxu0 %v711
        %v899 = vpop.f32.mrf.mxu0
        %v900 = vadd.f32 0.0, %v899
        %v901 = vpop.f32.mrf.mxu0
        %v902 = vpop.f32.mrf.mxu0
        %v903 = vadd.f32 0.0, %v902
        %v904 = vpop.f32.mrf.mxu0
        %905 = vmatprep.mubr.bf16.mxu0 0
        %906 = vmatmul.mubr.bf16.gmra.mxu0 %v712
        %v907 = vpop.f32.mrf.mxu0
        %v908 = vadd.f32 0.0, %v907
        %v909 = vpop.f32.mrf.mxu0
        %v910 = vpop.f32.mrf.mxu0
        %v911 = vadd.f32 0.0, %v910
        %v912 = vpop.f32.mrf.mxu0
        %913 = vmatprep.mubr.bf16.mxu0 0
        %914 = vmatmul.mubr.bf16.gmra.mxu0 %v713
        %v915 = vpop.f32.mrf.mxu0
        %v916 = vadd.f32 0.0, %v915
        %v917 = vpop.f32.mrf.mxu0
        %v918 = vpop.f32.mrf.mxu0
        %v919 = vadd.f32 0.0, %v918
        %v920 = vpop.f32.mrf.mxu0
        %921 = vmatprep.mubr.bf16.mxu0 0
        %922 = vmatmul.mubr.bf16.gmra.mxu0 %v714
        %v923 = vpop.f32.mrf.mxu0
        %v924 = vadd.f32 0.0, %v923
        %v925 = vpop.f32.mrf.mxu0
        %v926 = vpop.f32.mrf.mxu0
        %v927 = vadd.f32 0.0, %v926
        %v928 = vpop.f32.mrf.mxu0
        %929 = vmatprep.mubr.bf16.mxu0 0
        %930 = vmatmul.mubr.bf16.gmra.mxu0 %v715
        %v931 = vpop.f32.mrf.mxu0
        %v932 = vadd.f32 0.0, %v931
        %v933 = vpop.f32.mrf.mxu0
        %v934 = vpop.f32.mrf.mxu0
        %v935 = vadd.f32 0.0, %v934
        %v936 = vpop.f32.mrf.mxu0
        %937 = vmatprep.mubr.bf16.mxu0 0
        %938 = vmatmul.mubr.bf16.gmra.mxu0 %v716
        %v939 = vpop.f32.mrf.mxu0
        %v940 = vadd.f32 0.0, %v939
        %v941 = vpop.f32.mrf.mxu0
        %v942 = vpop.f32.mrf.mxu0
        %v943 = vadd.f32 0.0, %v942
        %v944 = vpop.f32.mrf.mxu0
        %945 = vmatprep.mubr.bf16.mxu0 0
        %946 = vmatmul.mubr.bf16.gmra.mxu0 %v717
        %v947 = vpop.f32.mrf.mxu0
        %v948 = vadd.f32 0.0, %v947
        %v949 = vpop.f32.mrf.mxu0
        %v950 = vpop.f32.mrf.mxu0
        %v951 = vadd.f32 0.0, %v950
        %v952 = vpop.f32.mrf.mxu0
        %953 = vmatprep.mubr.bf16.mxu0 0
        %954 = vmatmul.mubr.bf16.gmra.mxu0 %v718
        %v955 = vpop.f32.mrf.mxu0
        %v956 = vadd.f32 0.0, %v955
        %v957 = vpop.f32.mrf.mxu0
        %v958 = vpop.f32.mrf.mxu0
        %v959 = vadd.f32 0.0, %v958
        %v960 = vpop.f32.mrf.mxu0
        %961 = vmatprep.mubr.bf16.mxu0 0
        %962 = vmatmul.mubr.bf16.gmra.mxu0 %v719
        %v963 = vpop.f32.mrf.mxu0
        %v964 = vadd.f32 0.0, %v963
        %v965 = vpop.f32.mrf.mxu0
        %v966 = vpop.f32.mrf.mxu0
        %v967 = vadd.f32 0.0, %v966
        %v968 = vpop.f32.mrf.mxu0
        %969 = vmatprep.mubr.bf16.mxu0 0
        %970 = vmatmul.mubr.bf16.gmra.mxu0 %v720
        %v971 = vpop.f32.mrf.mxu0
        %v972 = vadd.f32 0.0, %v971
        %v973 = vpop.f32.mrf.mxu0
        %v974 = vpop.f32.mrf.mxu0
        %v975 = vadd.f32 0.0, %v974
        %v976 = vpop.f32.mrf.mxu0
        %977 = vmatprep.mubr.bf16.mxu0 0
        %978 = vmatmul.mubr.bf16.gmra.mxu0 %v721
        %v979 = vpop.f32.mrf.mxu0
        %v980 = vadd.f32 0.0, %v979
        %v981 = vpop.f32.mrf.mxu0
        %v982 = vpop.f32.mrf.mxu0
        %v983 = vadd.f32 0.0, %v982
        %v984 = vpop.f32.mrf.mxu0
        %985 = vmatprep.mubr.bf16.mxu0 0
        %986 = vmatmul.mubr.bf16.gmra.mxu0 %v722
        %v987 = vpop.f32.mrf.mxu0
        %v988 = vadd.f32 0.0, %v987
        %v989 = vpop.f32.mrf.mxu0
        %v990 = vpop.f32.mrf.mxu0
        %v991 = vadd.f32 0.0, %v990
        %v992 = vpop.f32.mrf.mxu0
        %993 = vmatprep.mubr.bf16.mxu0 0
        %994 = vmatmul.mubr.bf16.gmra.mxu0 %v723
        %v995 = vpop.f32.mrf.mxu0
        %v996 = vadd.f32 0.0, %v995
        %v997 = vpop.f32.mrf.mxu0
        %v998 = vpop.f32.mrf.mxu0
        %v999 = vadd.f32 0.0, %v998
        %v1000 = vpop.f32.mrf.mxu0
        %1001 = vmatprep.mubr.bf16.mxu0 0
        %1002 = vmatmul.mubr.bf16.gmra.mxu0 %v724
        %v1003 = vpop.f32.mrf.mxu0
        %v1004 = vadd.f32 0.0, %v1003
        %v1005 = vpop.f32.mrf.mxu0
        %v1006 = vpop.f32.mrf.mxu0
        %v1007 = vadd.f32 0.0, %v1006
        %v1008 = vpop.f32.mrf.mxu0
        %1009 = vmatprep.mubr.bf16.mxu0 0
        %1010 = vmatmul.mubr.bf16.gmra.mxu0 %v725
        %v1011 = vpop.f32.mrf.mxu0
        %v1012 = vadd.f32 0.0, %v1011
        %v1013 = vpop.f32.mrf.mxu0
        %v1014 = vpop.f32.mrf.mxu0
        %v1015 = vadd.f32 0.0, %v1014
        %v1016 = vpop.f32.mrf.mxu0
        %1017 = vmatprep.mubr.bf16.mxu0 0
        %1018 = vmatmul.mubr.bf16.gmra.mxu0 %v726
        %v1019 = vpop.f32.mrf.mxu0
        %v1020 = vadd.f32 0.0, %v1019
        %v1021 = vpop.f32.mrf.mxu0
        %v1022 = vpop.f32.mrf.mxu0
        %v1023 = vadd.f32 0.0, %v1022
        %v1024 = vpop.f32.mrf.mxu0
        %1025 = vmatprep.mubr.bf16.mxu0 0
        %1026 = vmatmul.mubr.bf16.gmra.mxu0 %v727
        %v1027 = vpop.f32.mrf.mxu0
        %v1028 = vadd.f32 0.0, %v1027
        %v1029 = vpop.f32.mrf.mxu0
        %v1030 = vpop.f32.mrf.mxu0
        %v1031 = vadd.f32 0.0, %v1030
        %v1032 = vpop.f32.mrf.mxu0
        %1033 = vmatprep.mubr.bf16.mxu0 0
        %1034 = vmatmul.mubr.bf16.gmra.mxu0 %v728
        %v1035 = vpop.f32.mrf.mxu0
        %v1036 = vadd.f32 0.0, %v1035
        %v1037 = vpop.f32.mrf.mxu0
        %v1038 = vpop.f32.mrf.mxu0
        %v1039 = vadd.f32 0.0, %v1038
        %v1040 = vpop.f32.mrf.mxu0
        %1041 = vmatprep.mubr.bf16.mxu0 0
        %1042 = vmatmul.mubr.bf16.gmra.mxu0 %v729
        %v1043 = vpop.f32.mrf.mxu0
        %v1044 = vadd.f32 0.0, %v1043
        %v1045 = vpop.f32.mrf.mxu0
        %v1046 = vpop.f32.mrf.mxu0
        %v1047 = vadd.f32 0.0, %v1046
        %v1048 = vpop.f32.mrf.mxu0
        %1049 = vmatprep.mubr.bf16.mxu0 0
        %1050 = vmatmul.mubr.bf16.gmra.mxu0 %v730
        %v1051 = vpop.f32.mrf.mxu0
        %v1052 = vadd.f32 0.0, %v1051
        %v1053 = vpop.f32.mrf.mxu0
        %v1054 = vpop.f32.mrf.mxu0
        %v1055 = vadd.f32 0.0, %v1054
        %v1056 = vpop.f32.mrf.mxu0
        %1057 = vmatprep.mubr.bf16.mxu0 0
        %1058 = vmatmul.mubr.bf16.gmra.mxu0 %v731
        %v1059 = vpop.f32.mrf.mxu0
        %v1060 = vadd.f32 0.0, %v1059
        %v1061 = vpop.f32.mrf.mxu0
        %v1062 = vpop.f32.mrf.mxu0
        %v1063 = vadd.f32 0.0, %v1062
        %v1064 = vpop.f32.mrf.mxu0
        %1065 = vmatprep.mubr.bf16.mxu0 0
        %1066 = vmatmul.mubr.bf16.gmra.mxu0 %v732
        %v1067 = vpop.f32.mrf.mxu0
        %v1068 = vadd.f32 0.0, %v1067
        %v1069 = vpop.f32.mrf.mxu0
        %v1070 = vpop.f32.mrf.mxu0
        %v1071 = vadd.f32 0.0, %v1070
        %v1072 = vpop.f32.mrf.mxu0
        %1073 = vmatprep.mubr.bf16.mxu0 0
        %1074 = vmatmul.mubr.bf16.gmra.mxu0 %v733
        %v1075 = vpop.f32.mrf.mxu0
        %v1076 = vadd.f32 0.0, %v1075
        %v1077 = vpop.f32.mrf.mxu0
        %v1078 = vpop.f32.mrf.mxu0
        %v1079 = vadd.f32 0.0, %v1078
        %v1080 = vpop.f32.mrf.mxu0
        %1081 = vmatprep.mubr.bf16.mxu0 0
        %1082 = vmatmul.mubr.bf16.gmra.mxu0 %v734
        %v1083 = vpop.f32.mrf.mxu0
        %v1084 = vadd.f32 0.0, %v1083
        %v1085 = vpop.f32.mrf.mxu0
        %v1086 = vpop.f32.mrf.mxu0
        %v1087 = vadd.f32 0.0, %v1086
        %v1088 = vpop.f32.mrf.mxu0
        %1089 = vmatprep.mubr.bf16.mxu0 0
        %1090 = vmatmul.mubr.bf16.gmra.mxu0 %v735
        %v1091 = vpop.f32.mrf.mxu0
        %v1092 = vadd.f32 0.0, %v1091
        %v1093 = vpop.f32.mrf.mxu0
        %v1094 = vpop.f32.mrf.mxu0
        %v1095 = vadd.f32 0.0, %v1094
        %v1096 = vpop.f32.mrf.mxu0
        %1097 = vmatprep.mubr.bf16.mxu0 0
        %1098 = vmatmul.mubr.bf16.gmra.mxu0 %v736
        %v1099 = vpop.f32.mrf.mxu0
        %v1100 = vadd.f32 0.0, %v1099
        %v1101 = vpop.f32.mrf.mxu0
        %v1102 = vpop.f32.mrf.mxu0
        %v1103 = vadd.f32 0.0, %v1102
        %v1104 = vpop.f32.mrf.mxu0
        %1105 = vdwg.mxu0
        %1106 = vst [vmem:[%s221] sm:$0xff] %v852
        %1107 = vst [vmem:[%s221 + $0x8] sm:$0xff] %v855
        %1108 = vst [vmem:[%s221 + $0x10] sm:$0xff] %v860
        %1109 = vst [vmem:[%s221 + $0x18] sm:$0xff] %v863
        %1110 = vst [vmem:[%s221 + $0x20] sm:$0xff] %v868
        %1111 = vst [vmem:[%s221 + $0x28] sm:$0xff] %v871
        %1112 = vst [vmem:[%s221 + $0x30] sm:$0xff] %v876
        %1113 = vst [vmem:[%s221 + $0x38] sm:$0xff] %v879
        %1114 = vst [vmem:[%s221 + $0x40] sm:$0xff] %v884
        %1115 = vst [vmem:[%s221 + $0x48] sm:$0xff] %v887
        %1116 = vst [vmem:[%s221 + $0x50] sm:$0xff] %v892
        %1117 = vst [vmem:[%s221 + $0x58] sm:$0xff] %v895
        %1118 = vst [vmem:[%s221 + $0x60] sm:$0xff] %v900
        %1119 = vst [vmem:[%s221 + $0x68] sm:$0xff] %v903
        %1120 = vst [vmem:[%s221 + $0x70] sm:$0xff] %v908
        %1121 = vst [vmem:[%s221 + $0x78] sm:$0xff] %v911
        %1122 = vst [vmem:[%s221 + $0x80] sm:$0xff] %v916
        %1123 = vst [vmem:[%s221 + $0x88] sm:$0xff] %v919
        %1124 = vst [vmem:[%s221 + $0x90] sm:$0xff] %v924
        %1125 = vst [vmem:[%s221 + $0x98] sm:$0xff] %v927
        %1126 = vst [vmem:[%s221 + $0xa0] sm:$0xff] %v932
        %1127 = vst [vmem:[%s221 + $0xa8] sm:$0xff] %v935
        %1128 = vst [vmem:[%s221 + $0xb0] sm:$0xff] %v940
        %1129 = vst [vmem:[%s221 + $0xb8] sm:$0xff] %v943
        %1130 = vst [vmem:[%s221 + $0xc0] sm:$0xff] %v948
        %1131 = vst [vmem:[%s221 + $0xc8] sm:$0xff] %v951
        %1132 = vst [vmem:[%s221 + $0xd0] sm:$0xff] %v956
        %1133 = vst [vmem:[%s221 + $0xd8] sm:$0xff] %v959
        %1134 = vst [vmem:[%s221 + $0xe0] sm:$0xff] %v964
        %1135 = vst [vmem:[%s221 + $0xe8] sm:$0xff] %v967
        %1136 = vst [vmem:[%s221 + $0xf0] sm:$0xff] %v972
        %1137 = vst [vmem:[%s221 + $0xf8] sm:$0xff] %v975
        %1138 = vst [vmem:[%s221 + $0x100] sm:$0xff] %v980
        %1139 = vst [vmem:[%s221 + $0x108] sm:$0xff] %v983
        %1140 = vst [vmem:[%s221 + $0x110] sm:$0xff] %v988
        %1141 = vst [vmem:[%s221 + $0x118] sm:$0xff] %v991
        %1142 = vst [vmem:[%s221 + $0x120] sm:$0xff] %v996
        %1143 = vst [vmem:[%s221 + $0x128] sm:$0xff] %v999
        %1144 = vst [vmem:[%s221 + $0x130] sm:$0xff] %v1004
        %1145 = vst [vmem:[%s221 + $0x138] sm:$0xff] %v1007
        %1146 = vst [vmem:[%s221 + $0x140] sm:$0xff] %v1012
        %1147 = vst [vmem:[%s221 + $0x148] sm:$0xff] %v1015
        %1148 = vst [vmem:[%s221 + $0x150] sm:$0xff] %v1020
        %1149 = vst [vmem:[%s221 + $0x158] sm:$0xff] %v1023
        %1150 = vst [vmem:[%s221 + $0x160] sm:$0xff] %v1028
        %1151 = vst [vmem:[%s221 + $0x168] sm:$0xff] %v1031
        %1152 = vst [vmem:[%s221 + $0x170] sm:$0xff] %v1036
        %1153 = vst [vmem:[%s221 + $0x178] sm:$0xff] %v1039
        %1154 = vst [vmem:[%s221 + $0x180] sm:$0xff] %v1044
        %1155 = vst [vmem:[%s221 + $0x188] sm:$0xff] %v1047
        %1156 = vst [vmem:[%s221 + $0x190] sm:$0xff] %v1052
        %1157 = vst [vmem:[%s221 + $0x198] sm:$0xff] %v1055
        %1158 = vst [vmem:[%s221 + $0x1a0] sm:$0xff] %v1060
        %1159 = vst [vmem:[%s221 + $0x1a8] sm:$0xff] %v1063
        %1160 = vst [vmem:[%s221 + $0x1b0] sm:$0xff] %v1068
        %1161 = vst [vmem:[%s221 + $0x1b8] sm:$0xff] %v1071
        %1162 = vst [vmem:[%s221 + $0x1c0] sm:$0xff] %v1076
        %1163 = vst [vmem:[%s221 + $0x1c8] sm:$0xff] %v1079
        %1164 = vst [vmem:[%s221 + $0x1d0] sm:$0xff] %v1084
        %1165 = vst [vmem:[%s221 + $0x1d8] sm:$0xff] %v1087
        %1166 = vst [vmem:[%s221 + $0x1e0] sm:$0xff] %v1092
        %1167 = vst [vmem:[%s221 + $0x1e8] sm:$0xff] %v1095
        %1168 = vst [vmem:[%s221 + $0x1f0] sm:$0xff] %v1100
        %1169 = vst [vmem:[%s221 + $0x1f8] sm:$0xff] %v1103
        %s1170 = sand.u32 %s117, 1
        %s1171 = scalar_lea.sflag [#allocation5], %s1170
        %s1172 = sand.u32 %s117, 1
        %s1173 = smul.addr %s1172, 512
        %s1174 = scalar_lea.vmem [#allocation6], %s1173
        // Predicated region
        $region41: #{tpu_custom_call.1} parent=31 // pred_check
          %p1175 = pneg %p127
        $region42: #{tpu_custom_call.1} parent=31 // pred_check_branch
          %1177 = sbr.rel (%p1175) target = $region44
        $region43: #{tpu_custom_call.1} parent=31 // pred_region
          %s1178 = smul.u32 64, %s25
          %s1180 = ssub.s32 8192, 8192
          %1181 = vsyncadd %s1171, %s1180
          %s1182 = smul.addr %s24, 128
          %s1183 = sadd.s32 %s1178, %s1182
          %s1184 = smul.addr %s1183, 128
          %s1185 = scalar_lea.hbm %s3, %s1184
          %s1186 = sshll.u32 %s1174, 4
          %s1187 = int_to_ptr.vmem [resolvable:$true] %s1186
          %1192 = dma.vmem_to_hbm [thread:$0]  %s1187, 8192, %s1185, %s1171, 128, 128, 8
        $region44: #{tpu_custom_call.1} parent=31 // pred_fallthru
          _
      $region32: #{tpu_custom_call.1} parent=5 // pred_fallthru
        _
      %p1193 = scmp.le.s32.totalorder 2, %s15
      // Predicated region
      $region45: #{tpu_custom_call.1} parent=5 // pred_check
        %p1194 = pneg %p1193
      $region46: #{tpu_custom_call.1} parent=5 // pred_check_branch
        %1196 = sbr.rel (%p1194) target = $region48
      $region47: #{tpu_custom_call.1} parent=5 // pred_region
        %s1197 = ssub.s32 %s15, 2
        // Predicated region
        $region49: #{tpu_custom_call.1} parent=47 // pred_check
          %p1198 = pneg %p133
        $region50: #{tpu_custom_call.1} parent=47 // pred_check_branch
          %1200 = sbr.rel (%p1198) target = $region52
        $region51: #{tpu_custom_call.1} parent=47 // pred_region
          %s1201 = sand.u32 %s118, 1
          %s1202 = scalar_lea.sflag [#allocation5], %s1201
          %s1203 = sand.u32 %s118, 1
          %s1204 = smul.addr %s1203, 512
          %s1205 = scalar_lea.vmem [#allocation6], %s1204
          %1206 = dma.done %s1202, 8192
        $region52: #{tpu_custom_call.1} parent=47 // pred_fallthru
          _
      $region48: #{tpu_custom_call.1} parent=5 // pred_fallthru
        _
    $region6: #{tpu_custom_call.1} parent=1 // loop_footer
      %s19 = sadd.s32 1, %s15
    $region7: #{tpu_custom_call.1} parent=1 // loop_footer_branch
      %14 = sbr.rel target = $region3
    $region8: #{tpu_custom_call.1} parent=1 // loop_exit
      _
    %1207 = vsyncpa [#allocation4], 1
    %s1208 = scalar_lea.sflag [#allocation4], 1
    %1209 = vsyncpa %s1208, 1
    %1210 = vsyncpa [#allocation5], 1
    %s1211 = scalar_lea.sflag [#allocation5], 1
    %1212 = vsyncpa %s1211, 1

</llo_original>
